<compile_context>
chip_gen: v5e
topology: v5e:2x2
jax: 0.10.0
libtpu: 0.0.40
codegen_flags: <defaults>
</compile_context>

<pallas_src>
import functools

import jax
import jax.numpy as jnp
from jax import lax
from jax.experimental import pallas as pl
from jax.experimental.pallas import tpu as pltpu


# ---------------------------------------------------------------------------
# Kernel
# ---------------------------------------------------------------------------
def _layernorm(x, gamma, beta, eps=1e-5):
    mu = jnp.mean(x, axis=-1, keepdims=True)
    var = jnp.mean((x - mu) ** 2, axis=-1, keepdims=True)
    return (x - mu) * lax.rsqrt(var + eps) * gamma + beta


def fused_encoder_kernel(
    x_ref,                              # [G, N, T]  inverted inputs, this batch block
    emb_w_ref, emb_b_ref,               # [T, D], [1, D]      (shared, VMEM-resident)
    wqkv_ref, bqkv_ref,                 # [D, 3D], [1, 3D]    (layer-l slice, streamed)
    wo_ref, bo_ref,                     # [D, D], [1, D]
    w1_ref, b1_ref,                     # [D, F], [1, F]
    w2_ref, b2_ref,                     # [F, D], [1, D]
    g1_ref, be1_ref, g2_ref, be2_ref,   # [1, D] each
    ng_ref, nb_ref,                     # [1, D]              (shared)
    o_ref,                              # [G, N, D]
    h_scr,                              # VMEM [G*N, D] f32 : hidden state carried over l
    attn_scr,                           # VMEM [G*N, D] f32 : per-head PV assembly
    *, n_heads, head_dim, compute_dtype,
):
    l = pl.program_id(1)
    G, N, _ = x_ref.shape
    D = n_heads * head_dim
    cd = compute_dtype

    def mm(a, b):                        # a @ b with f32 accumulation
        return jnp.dot(a, b, preferred_element_type=jnp.float32)

    def mm_nt(a, b):                     # a @ b.T without materializing a transpose
        return lax.dot_general(a, b, (((1,), (1,)), ((), ())),
                               preferred_element_type=jnp.float32)

    # --- DataEmbedding_inverted: Linear(seq_len -> hidden_dim), first layer step only ----
    @pl.when(l == 0)
    def _():
        emb_w = emb_w_ref[...]
        emb_b = emb_b_ref[...]
        for g in range(G):               # per element: avoids an in-kernel reshape
            h_scr[g * N:(g + 1) * N, :] = mm(x_ref[g].astype(cd), emb_w) + emb_b

    h = h_scr[...]                       # [G*N, D] f32 carried state
    hc = h.astype(cd)                    # cast once; reused for the QKV matmul

    # --- attention: fused QKV, per-(element, head) scores, ONE concatenated Wo matmul ----
    qkv = mm(hc, wqkv_ref[...]) + bqkv_ref[...]          # [G*N, 3D] f32
    # 1/sqrt(head_dim) already folded into Wq / bq in the wrapper
    q = qkv[:, :D].astype(cd)
    k = qkv[:, D:2 * D].astype(cd)
    v = qkv[:, 2 * D:].astype(cd)

    for g in range(G):                   # score / PV matmuls stay per batch element
        r0 = g * N
        for hh in range(n_heads):        # static unroll over heads (small count)
            c0 = hh * head_dim
            s = mm_nt(q[r0:r0 + N, c0:c0 + head_dim],
                      k[r0:r0 + N, c0:c0 + head_dim])    # [N, N] f32 scores
            s = s - jnp.max(s, axis=-1, keepdims=True)
            p = jnp.exp(s)
            # approx reciprocal runs on the otherwise-idle EUP slot (~1e-3 rel error)
            p = p * pl.reciprocal(jnp.sum(p, axis=-1, keepdims=True), approx=True)
            attn_scr[r0:r0 + N, c0:c0 + head_dim] = mm(
                p.astype(cd), v[r0:r0 + N, c0:c0 + head_dim])        # [N, head_dim]

    # concat(heads) @ Wo as a single K=D matmul (instead of n_heads K=head_dim matmuls)
    attn = mm(attn_scr[...].astype(cd), wo_ref[...]) + bo_ref[...]   # [G*N, D]

    h = _layernorm(h + attn, g1_ref[...], be1_ref[...])              # norm1
    y = jnp.maximum(mm(h.astype(cd), w1_ref[...]) + b1_ref[...], 0.0)   # FFN, relu
    y = mm(y.astype(cd), w2_ref[...]) + b2_ref[...]
    h = _layernorm(h + y, g2_ref[...], be2_ref[...])                 # norm2
    h_scr[...] = h                                                   # carry to next layer

    # --- final encoder LayerNorm + output store, last layer step only --------------------
    @pl.when(l == pl.num_programs(1) - 1)
    def _():
        out = _layernorm(h, ng_ref[...], nb_ref[...])
        for g in range(G):
            o_ref[g] = out[g * N:(g + 1) * N, :].astype(o_ref.dtype)


# ---------------------------------------------------------------------------
# Wrapper
# ---------------------------------------------------------------------------
def _shared_spec(shape):
    nd = len(shape)
    return pl.BlockSpec(tuple(shape), lambda b, l, _nd=nd: (0,) * _nd)


def _layer_spec(shape):
    # shape = (L, ...): stream one layer slice per step along the (last, "arbitrary") axis
    tail = tuple(shape[1:])
    nd = len(tail)
    return pl.BlockSpec((None,) + tail, lambda b, l, _nd=nd: (l,) + (0,) * _nd)


def da_transformer_forward(x_enc, params, feature_head_num,
                           compute_dtype=jnp.float32, group_size=None,
                           vmem_limit_bytes=48 * 1024 * 1024):
    """x_enc: [B, T, N] -> [B, hidden_dim, N] (matches enc_out.permute(0, 2, 1))."""
    B, T, N = x_enc.shape
    D = params["emb_w"].shape[1]
    L = params["wqkv"].shape[0]
    F = params["w1"].shape[-1]
    head_dim = D // feature_head_num

    if group_size is None:
        # Fill the MXU M dimension (~256 rows) but keep >= 2 batch blocks when possible
        # so both v7x TensorCores get work; require divisibility.
        group_size = max(1, min(B, -(-256 // N)))
        while group_size > 1 and B // group_size < 2:
            group_size -= 1
        while B % group_size:
            group_size -= 1
    G = group_size
    assert B % G == 0, (B, G)

    # Inverted layout (variates on sublanes, time on lanes). Tiny XLA op at demo size.
    x_bnt = jnp.transpose(x_enc, (0, 2, 1))                       # [B, N, T]

    # Fold the 1/sqrt(head_dim) attention scale into the Q projection (numerically equiv.)
    scale = 1.0 / (head_dim ** 0.5)
    wqkv = params["wqkv"].at[:, :, :D].multiply(scale)
    bqkv = params["bqkv"].at[:, :, :D].multiply(scale)

    cast = lambda w: w.astype(compute_dtype)   # matmul operands only; LN/bias stay f32
    shared_pre = (cast(params["emb_w"]), params["emb_b"])
    per_layer = (cast(wqkv), bqkv,
                 cast(params["wo"]), params["bo"],
                 cast(params["w1"]), params["b1"],
                 cast(params["w2"]), params["b2"],
                 params["g1"], params["be1"], params["g2"], params["be2"])
    shared_post = (params["norm_g"], params["norm_b"])

    in_specs = ([pl.BlockSpec((G, N, T), lambda b, l: (b, 0, 0))]
                + [_shared_spec(w.shape) for w in shared_pre]
                + [_layer_spec(w.shape) for w in per_layer]
                + [_shared_spec(w.shape) for w in shared_post])

    kernel = functools.partial(fused_encoder_kernel, n_heads=feature_head_num,
                               head_dim=head_dim, compute_dtype=compute_dtype)

    weight_bytes = sum(int(w.size) * w.dtype.itemsize
                       for w in shared_pre + per_layer + shared_post)
    flops = (2 * B * N * T * D
             + L * B * N * (2 * 3 * D * D      # fused QKV
                            + 4 * N * D        # scores + PV (all heads)
                            + 2 * D * D        # output projection
                            + 4 * D * F))      # FFN
    cost = pl.CostEstimate(
        flops=int(flops),
        transcendentals=int(B * L * feature_head_num * N * N),
        bytes_accessed=int(x_enc.size * x_enc.dtype.itemsize
                           + B * N * D * 4 + weight_bytes))

    h = pl.pallas_call(
        kernel,
        out_shape=jax.ShapeDtypeStruct((B, N, D), jnp.float32),
        grid=(B // G, L),
        in_specs=in_specs,
        out_specs=pl.BlockSpec((G, N, D), lambda b, l: (b, 0, 0)),
        scratch_shapes=[pltpu.VMEM((G * N, D), jnp.float32),     # hidden-state carry
                        pltpu.VMEM((G * N, D), jnp.float32)],    # per-head PV assembly
        compiler_params=pltpu.CompilerParams(
            dimension_semantics=("parallel", "arbitrary"),
            vmem_limit_bytes=vmem_limit_bytes),
        cost_estimate=cost,
    )(x_bnt, *shared_pre, *per_layer, *shared_post)

    # TODO(synk): at production sizes, emit the [D, N]-transposed tile from the kernel
    # epilogue instead of this wrapper transpose (extra HBM round-trip); negligible here.
    return jnp.transpose(h, (0, 2, 1))                            # [B, D, N]


# ---------------------------------------------------------------------------
# Deterministic parameter init (synthetic; mirrors module __init__ shapes)
# ---------------------------------------------------------------------------
def init_params(key, seq_len, hidden_dim, fc_layer_dim, n_layers):
    D, F = hidden_dim, fc_layer_dim
    keys = iter(jax.random.split(key, 4 + 14 * n_layers))
    s = 0.05

    def rnd(shape):
        return s * jax.random.normal(next(keys), shape, jnp.float32)

    params = {
        "emb_w": rnd((seq_len, D)),
        "emb_b": rnd((1, D)),
        "norm_g": 1.0 + rnd((1, D)),
        "norm_b": rnd((1, D)),
    }
    wqkv, bqkv, wo, bo = [], [], [], []
    w1, b1, w2, b2 = [], [], [], []
    g1, be1, g2, be2 = [], [], [], []
    for _ in range(n_layers):
        wq_, wk_, wv_ = rnd((D, D)), rnd((D, D)), rnd((D, D))
        wqkv.append(jnp.concatenate([wq_, wk_, wv_], axis=1))     # [D, 3D]
        bqkv.append(rnd((1, 3 * D)))
        wo.append(rnd((D, D))); bo.append(rnd((1, D)))
        w1.append(rnd((D, F))); b1.append(rnd((1, F)))
        w2.append(rnd((F, D))); b2.append(rnd((1, D)))
        g1.append(1.0 + rnd((1, D))); be1.append(rnd((1, D)))
        g2.append(1.0 + rnd((1, D))); be2.append(rnd((1, D)))
    params.update(
        wqkv=jnp.stack(wqkv), bqkv=jnp.stack(bqkv),
        wo=jnp.stack(wo), bo=jnp.stack(bo),
        w1=jnp.stack(w1), b1=jnp.stack(b1),
        w2=jnp.stack(w2), b2=jnp.stack(b2),
        g1=jnp.stack(g1), be1=jnp.stack(be1),
        g2=jnp.stack(g2), be2=jnp.stack(be2),
    )
    # NOTE: self.decoder = Linear(hidden_dim, seq_len) exists in __init__ but is never
    # applied in forward(), so it is intentionally not created here.
    return params


# ---------------------------------------------------------------------------
# Pure-JAX reference (f32) for verification
# ---------------------------------------------------------------------------
def _ref_ln(x, g, b, eps=1e-5):
    mu = x.mean(-1, keepdims=True)
    var = ((x - mu) ** 2).mean(-1, keepdims=True)
    return (x - mu) / jnp.sqrt(var + eps) * g + b


def ref_forward(x_enc, params, n_heads):
    x = jnp.transpose(x_enc, (0, 2, 1))
    h = x @ params["emb_w"] + params["emb_b"]
    B, N, D = h.shape
    dk = D // n_heads
    for l in range(params["wqkv"].shape[0]):
        wq, wk, wv = jnp.split(params["wqkv"][l], 3, axis=1)
        bq, bk, bv = jnp.split(params["bqkv"][l], 3, axis=1)
        q = (h @ wq + bq).reshape(B, N, n_heads, dk)
        k = (h @ wk + bk).reshape(B, N, n_heads, dk)
        v = (h @ wv + bv).reshape(B, N, n_heads, dk)
        s = jnp.einsum("bqhd,bkhd->bhqk", q, k) / jnp.sqrt(jnp.float32(dk))
        a = jax.nn.softmax(s, axis=-1)
        o = jnp.einsum("bhqk,bkhd->bqhd", a, v).reshape(B, N, D)
        o = o @ params["wo"][l] + params["bo"][l]
        h = _ref_ln(h + o, params["g1"][l], params["be1"][l])
        y = jnp.maximum(h @ params["w1"][l] + params["b1"][l], 0.0)
        y = y @ params["w2"][l] + params["b2"][l]
        h = _ref_ln(h + y, params["g2"][l], params["be2"][l])
    h = _ref_ln(h, params["norm_g"], params["norm_b"])
    return jnp.transpose(h, (0, 2, 1))


# ---------------------------------------------------------------------------
if __name__ == "__main__":
    B = 2              # batch
    T = 8              # sequence_len (== seq_len == pred_len)
    N = 16             # feature_len (number of variates / attention tokens)
    D = 32             # hidden_dim
    d_ff = 64          # fc_layer_dim
    n_layers = 2       # rnn_num_layers (== number of encoder layers)
    n_heads = 4        # feature_head_num (heads inside AttentionLayer)

    key = jax.random.PRNGKey(0)
    kx, kp = jax.random.split(key)
    x_enc = jax.random.normal(kx, (B, T, N), jnp.float32)
    params = init_params(kp, T, D, d_ff, n_layers)

    ref = ref_forward(x_enc, params, n_heads)

    # f32 path, auto group size (-> G=1 here: two parallel batch blocks).
    fwd = jax.jit(functools.partial(da_transformer_forward,
                                    feature_head_num=n_heads))
    out = jax.block_until_ready(fwd(x_enc, params))
    assert out.shape == (B, D, N), out.shape
    err = float(jnp.max(jnp.abs(out - ref)))
    assert jnp.allclose(out, ref, atol=2e-3, rtol=2e-3), err

    # f32 path with G=2 batch elements stacked per grid step (fills the MXU M dimension).
    fwd_g2 = jax.jit(functools.partial(da_transformer_forward,
                                       feature_head_num=n_heads, group_size=2))
    out_g2 = jax.block_until_ready(fwd_g2(x_enc, params))
    err_g2 = float(jnp.max(jnp.abs(out_g2 - ref)))
    assert jnp.allclose(out_g2, ref, atol=2e-3, rtol=2e-3), err_g2

    # bf16-MXU-operand path (f32 accumulation, f32 LayerNorm/softmax): loose sanity check.
    fwd_bf16 = jax.jit(functools.partial(da_transformer_forward,
                                         feature_head_num=n_heads,
                                         compute_dtype=jnp.bfloat16, group_size=2))
    out_bf16 = jax.block_until_ready(fwd_bf16(x_enc, params))
    err_bf16 = float(jnp.max(jnp.abs(out_bf16 - ref)))
    assert err_bf16 < 5e-2, err_bf16

    print("KERNEL_OK")
</pallas_src>

<mosaic_0001>
module attributes {stable_mosaic.version = 11 : i64} {
  func.func @fused_encoder_kernel(%arg0: i32, %arg1: i32, %arg2: memref<1x16x8xf32, #tpu.memory_space<vmem>>, %arg3: memref<8x32xf32, #tpu.memory_space<vmem>>, %arg4: memref<1x32xf32, #tpu.memory_space<vmem>>, %arg5: memref<1x32x96xf32, #tpu.memory_space<vmem>>, %arg6: memref<1x1x96xf32, #tpu.memory_space<vmem>>, %arg7: memref<1x32x32xf32, #tpu.memory_space<vmem>>, %arg8: memref<1x1x32xf32, #tpu.memory_space<vmem>>, %arg9: memref<1x32x64xf32, #tpu.memory_space<vmem>>, %arg10: memref<1x1x64xf32, #tpu.memory_space<vmem>>, %arg11: memref<1x64x32xf32, #tpu.memory_space<vmem>>, %arg12: memref<1x1x32xf32, #tpu.memory_space<vmem>>, %arg13: memref<1x1x32xf32, #tpu.memory_space<vmem>>, %arg14: memref<1x1x32xf32, #tpu.memory_space<vmem>>, %arg15: memref<1x1x32xf32, #tpu.memory_space<vmem>>, %arg16: memref<1x1x32xf32, #tpu.memory_space<vmem>>, %arg17: memref<1x32xf32, #tpu.memory_space<vmem>>, %arg18: memref<1x32xf32, #tpu.memory_space<vmem>>, %arg19: memref<1x16x32xf32, #tpu.memory_space<vmem>>, %arg20: memref<16x32xf32, #tpu.memory_space<vmem>>, %arg21: memref<16x32xf32, #tpu.memory_space<vmem>>) attributes {dimension_semantics = [#tpu.dimension_semantics<parallel>, #tpu.dimension_semantics<arbitrary>], iteration_bounds = array<i64: 2, 2>, scalar_prefetch = 0 : i64, scratch_operands = 2 : i64, tpu.core_type = #tpu.core_type<tc>, window_params = [{transform_indices = @transform_0, window_bounds = array<i64: 1, 16, 8>}, {pipeline_mode = #tpu.pipeline_mode<synchronous>, transform_indices = @transform_1, window_bounds = array<i64: 8, 32>}, {pipeline_mode = #tpu.pipeline_mode<synchronous>, transform_indices = @transform_2, window_bounds = array<i64: 1, 32>}, {transform_indices = @transform_3, window_bounds = array<i64: 1, 32, 96>}, {transform_indices = @transform_4, window_bounds = array<i64: 1, 1, 96>}, {transform_indices = @transform_5, window_bounds = array<i64: 1, 32, 32>}, {transform_indices = @transform_6, window_bounds = array<i64: 1, 1, 32>}, {transform_indices = @transform_7, window_bounds = array<i64: 1, 32, 64>}, {transform_indices = @transform_8, window_bounds = array<i64: 1, 1, 64>}, {transform_indices = @transform_9, window_bounds = array<i64: 1, 64, 32>}, {transform_indices = @transform_10, window_bounds = array<i64: 1, 1, 32>}, {transform_indices = @transform_11, window_bounds = array<i64: 1, 1, 32>}, {transform_indices = @transform_12, window_bounds = array<i64: 1, 1, 32>}, {transform_indices = @transform_13, window_bounds = array<i64: 1, 1, 32>}, {transform_indices = @transform_14, window_bounds = array<i64: 1, 1, 32>}, {pipeline_mode = #tpu.pipeline_mode<synchronous>, transform_indices = @transform_15, window_bounds = array<i64: 1, 32>}, {pipeline_mode = #tpu.pipeline_mode<synchronous>, transform_indices = @transform_16, window_bounds = array<i64: 1, 32>}, {transform_indices = @transform_17, window_bounds = array<i64: 1, 16, 32>}]} {
    %c0_i32 = arith.constant 0 : i32
    %0 = arith.cmpi eq, %arg1, %c0_i32 : i32
    %1 = arith.extui %0 : i1 to i32
    %c0_i32_0 = arith.constant 0 : i32
    %2 = arith.cmpi ne, %1, %c0_i32_0 : i32
    scf.if %2 {
      %c0_78 = arith.constant 0 : index
      %c0_79 = arith.constant 0 : index
      %160 = vector.load %arg3[%c0_78, %c0_79] : memref<8x32xf32, #tpu.memory_space<vmem>>, vector<8x32xf32>
      %c0_80 = arith.constant 0 : index
      %c0_81 = arith.constant 0 : index
      %161 = vector.load %arg4[%c0_80, %c0_81] : memref<1x32xf32, #tpu.memory_space<vmem>>, vector<1x32xf32>
      %c0_82 = arith.constant 0 : index
      %c0_83 = arith.constant 0 : index
      %c0_84 = arith.constant 0 : index
      %162 = vector.load %arg2[%c0_82, %c0_83, %c0_84] : memref<1x16x8xf32, #tpu.memory_space<vmem>>, vector<1x16x8xf32>
      %163 = vector.shape_cast %162 : vector<1x16x8xf32> to vector<16x8xf32>
      %cst_85 = arith.constant dense<0.000000e+00> : vector<16x32xf32>
      %164 = tpu.matmul %163, %160, %cst_85 {dimension_numbers = #tpu.dot_dimension_numbers<[1], [0], [0], [1], [0, 0, 1, 1], [], []>} : vector<16x8xf32>, vector<8x32xf32>, vector<16x32xf32> -> vector<16x32xf32>
      %165 = vector.broadcast %161 : vector<1x32xf32> to vector<16x32xf32>
      %166 = arith.addf %164, %165 : vector<16x32xf32>
      %c0_86 = arith.constant 0 : index
      %c0_87 = arith.constant 0 : index
      %167 = vector.load %arg20[%c0_86, %c0_87] : memref<16x32xf32, #tpu.memory_space<vmem>>, vector<16x32xf32>
      tpu.vector_store %arg20[%c0_86, %c0_87], %166 {strides = array<i32>} : memref<16x32xf32, #tpu.memory_space<vmem>>, vector<16x32xf32>,
    } else {
    }
    %c0 = arith.constant 0 : index
    %c0_1 = arith.constant 0 : index
    %3 = vector.load %arg20[%c0, %c0_1] : memref<16x32xf32, #tpu.memory_space<vmem>>, vector<16x32xf32>
    %c0_2 = arith.constant 0 : index
    %c0_3 = arith.constant 0 : index
    %c0_4 = arith.constant 0 : index
    %4 = vector.load %arg5[%c0_2, %c0_3, %c0_4] : memref<1x32x96xf32, #tpu.memory_space<vmem>>, vector<1x32x96xf32>
    %5 = vector.shape_cast %4 : vector<1x32x96xf32> to vector<32x96xf32>
    %cst = arith.constant dense<0.000000e+00> : vector<16x96xf32>
    %6 = tpu.matmul %3, %5, %cst {dimension_numbers = #tpu.dot_dimension_numbers<[1], [0], [0], [1], [0, 0, 1, 1], [], []>} : vector<16x32xf32>, vector<32x96xf32>, vector<16x96xf32> -> vector<16x96xf32>
    %c0_5 = arith.constant 0 : index
    %c0_6 = arith.constant 0 : index
    %c0_7 = arith.constant 0 : index
    %7 = vector.load %arg6[%c0_5, %c0_6, %c0_7] : memref<1x1x96xf32, #tpu.memory_space<vmem>>, vector<1x1x96xf32>
    %8 = vector.shape_cast %7 : vector<1x1x96xf32> to vector<1x96xf32>
    %9 = vector.broadcast %8 : vector<1x96xf32> to vector<16x96xf32>
    %10 = arith.addf %6, %9 : vector<16x96xf32>
    %11 = vector.extract_strided_slice %10 {offsets = [0, 0], sizes = [16, 32], strides = [1, 1]} : vector<16x96xf32> to vector<16x32xf32>
    %12 = vector.extract_strided_slice %10 {offsets = [0, 32], sizes = [16, 32], strides = [1, 1]} : vector<16x96xf32> to vector<16x32xf32>
    %13 = vector.extract_strided_slice %10 {offsets = [0, 64], sizes = [16, 32], strides = [1, 1]} : vector<16x96xf32> to vector<16x32xf32>
    %14 = vector.extract_strided_slice %11 {offsets = [0, 0], sizes = [16, 8], strides = [1, 1]} : vector<16x32xf32> to vector<16x8xf32>
    %15 = vector.extract_strided_slice %12 {offsets = [0, 0], sizes = [16, 8], strides = [1, 1]} : vector<16x32xf32> to vector<16x8xf32>
    %cst_8 = arith.constant dense<0.000000e+00> : vector<16x16xf32>
    %16 = tpu.matmul %14, %15, %cst_8 {dimension_numbers = #tpu.dot_dimension_numbers<[1], [1], [0], [0], [0, 0, 1, 0], [], []>} : vector<16x8xf32>, vector<16x8xf32>, vector<16x16xf32> -> vector<16x16xf32>
    %cst_9 = arith.constant dense<0xFF800000> : vector<16xf32>
    %17 = vector.multi_reduction <maximumf>, %16, %cst_9 [1] : vector<16x16xf32> to vector<16xf32>
    %18 = vector.shape_cast %17 : vector<16xf32> to vector<16x1xf32>
    %19 = vector.broadcast %18 : vector<16x1xf32> to vector<16x16xf32>
    %20 = arith.subf %16, %19 : vector<16x16xf32>
    %21 = math.exp %20 : vector<16x16xf32>
    %cst_10 = arith.constant dense<0.000000e+00> : vector<16xf32>
    %22 = vector.multi_reduction <add>, %21, %cst_10 [1] : vector<16x16xf32> to vector<16xf32>
    %23 = vector.shape_cast %22 : vector<16xf32> to vector<16x1xf32>
    %24 = tpu.reciprocal %23 {approx = true} : vector<16x1xf32> -> vector<16x1xf32>
    %25 = vector.broadcast %24 : vector<16x1xf32> to vector<16x16xf32>
    %26 = arith.mulf %21, %25 : vector<16x16xf32>
    %27 = vector.extract_strided_slice %13 {offsets = [0, 0], sizes = [16, 8], strides = [1, 1]} : vector<16x32xf32> to vector<16x8xf32>
    %cst_11 = arith.constant dense<0.000000e+00> : vector<16x8xf32>
    %28 = tpu.matmul %26, %27, %cst_11 {dimension_numbers = #tpu.dot_dimension_numbers<[1], [0], [0], [1], [0, 0, 1, 1], [], []>} : vector<16x16xf32>, vector<16x8xf32>, vector<16x8xf32> -> vector<16x8xf32>
    %c0_12 = arith.constant 0 : index
    %c0_13 = arith.constant 0 : index
    %29 = vector.load %arg21[%c0_12, %c0_13] : memref<16x32xf32, #tpu.memory_space<vmem>>, vector<16x8xf32>
    tpu.vector_store %arg21[%c0_12, %c0_13], %28 {strides = array<i32>} : memref<16x32xf32, #tpu.memory_space<vmem>>, vector<16x8xf32>,
    %30 = vector.extract_strided_slice %11 {offsets = [0, 8], sizes = [16, 8], strides = [1, 1]} : vector<16x32xf32> to vector<16x8xf32>
    %31 = vector.extract_strided_slice %12 {offsets = [0, 8], sizes = [16, 8], strides = [1, 1]} : vector<16x32xf32> to vector<16x8xf32>
    %cst_14 = arith.constant dense<0.000000e+00> : vector<16x16xf32>
    %32 = tpu.matmul %30, %31, %cst_14 {dimension_numbers = #tpu.dot_dimension_numbers<[1], [1], [0], [0], [0, 0, 1, 0], [], []>} : vector<16x8xf32>, vector<16x8xf32>, vector<16x16xf32> -> vector<16x16xf32>
    %cst_15 = arith.constant dense<0xFF800000> : vector<16xf32>
    %33 = vector.multi_reduction <maximumf>, %32, %cst_15 [1] : vector<16x16xf32> to vector<16xf32>
    %34 = vector.shape_cast %33 : vector<16xf32> to vector<16x1xf32>
    %35 = vector.broadcast %34 : vector<16x1xf32> to vector<16x16xf32>
    %36 = arith.subf %32, %35 : vector<16x16xf32>
    %37 = math.exp %36 : vector<16x16xf32>
    %cst_16 = arith.constant dense<0.000000e+00> : vector<16xf32>
    %38 = vector.multi_reduction <add>, %37, %cst_16 [1] : vector<16x16xf32> to vector<16xf32>
    %39 = vector.shape_cast %38 : vector<16xf32> to vector<16x1xf32>
    %40 = tpu.reciprocal %39 {approx = true} : vector<16x1xf32> -> vector<16x1xf32>
    %41 = vector.broadcast %40 : vector<16x1xf32> to vector<16x16xf32>
    %42 = arith.mulf %37, %41 : vector<16x16xf32>
    %43 = vector.extract_strided_slice %13 {offsets = [0, 8], sizes = [16, 8], strides = [1, 1]} : vector<16x32xf32> to vector<16x8xf32>
    %cst_17 = arith.constant dense<0.000000e+00> : vector<16x8xf32>
    %44 = tpu.matmul %42, %43, %cst_17 {dimension_numbers = #tpu.dot_dimension_numbers<[1], [0], [0], [1], [0, 0, 1, 1], [], []>} : vector<16x16xf32>, vector<16x8xf32>, vector<16x8xf32> -> vector<16x8xf32>
    %c0_18 = arith.constant 0 : index
    %c8 = arith.constant 8 : index
    %45 = vector.load %arg21[%c0_18, %c8] : memref<16x32xf32, #tpu.memory_space<vmem>>, vector<16x8xf32>
    tpu.vector_store %arg21[%c0_18, %c8], %44 {strides = array<i32>} : memref<16x32xf32, #tpu.memory_space<vmem>>, vector<16x8xf32>,
    %46 = vector.extract_strided_slice %11 {offsets = [0, 16], sizes = [16, 8], strides = [1, 1]} : vector<16x32xf32> to vector<16x8xf32>
    %47 = vector.extract_strided_slice %12 {offsets = [0, 16], sizes = [16, 8], strides = [1, 1]} : vector<16x32xf32> to vector<16x8xf32>
    %cst_19 = arith.constant dense<0.000000e+00> : vector<16x16xf32>
    %48 = tpu.matmul %46, %47, %cst_19 {dimension_numbers = #tpu.dot_dimension_numbers<[1], [1], [0], [0], [0, 0, 1, 0], [], []>} : vector<16x8xf32>, vector<16x8xf32>, vector<16x16xf32> -> vector<16x16xf32>
    %cst_20 = arith.constant dense<0xFF800000> : vector<16xf32>
    %49 = vector.multi_reduction <maximumf>, %48, %cst_20 [1] : vector<16x16xf32> to vector<16xf32>
    %50 = vector.shape_cast %49 : vector<16xf32> to vector<16x1xf32>
    %51 = vector.broadcast %50 : vector<16x1xf32> to vector<16x16xf32>
    %52 = arith.subf %48, %51 : vector<16x16xf32>
    %53 = math.exp %52 : vector<16x16xf32>
    %cst_21 = arith.constant dense<0.000000e+00> : vector<16xf32>
    %54 = vector.multi_reduction <add>, %53, %cst_21 [1] : vector<16x16xf32> to vector<16xf32>
    %55 = vector.shape_cast %54 : vector<16xf32> to vector<16x1xf32>
    %56 = tpu.reciprocal %55 {approx = true} : vector<16x1xf32> -> vector<16x1xf32>
    %57 = vector.broadcast %56 : vector<16x1xf32> to vector<16x16xf32>
    %58 = arith.mulf %53, %57 : vector<16x16xf32>
    %59 = vector.extract_strided_slice %13 {offsets = [0, 16], sizes = [16, 8], strides = [1, 1]} : vector<16x32xf32> to vector<16x8xf32>
    %cst_22 = arith.constant dense<0.000000e+00> : vector<16x8xf32>
    %60 = tpu.matmul %58, %59, %cst_22 {dimension_numbers = #tpu.dot_dimension_numbers<[1], [0], [0], [1], [0, 0, 1, 1], [], []>} : vector<16x16xf32>, vector<16x8xf32>, vector<16x8xf32> -> vector<16x8xf32>
    %c0_23 = arith.constant 0 : index
    %c16 = arith.constant 16 : index
    %61 = vector.load %arg21[%c0_23, %c16] : memref<16x32xf32, #tpu.memory_space<vmem>>, vector<16x8xf32>
    tpu.vector_store %arg21[%c0_23, %c16], %60 {strides = array<i32>} : memref<16x32xf32, #tpu.memory_space<vmem>>, vector<16x8xf32>,
    %62 = vector.extract_strided_slice %11 {offsets = [0, 24], sizes = [16, 8], strides = [1, 1]} : vector<16x32xf32> to vector<16x8xf32>
    %63 = vector.extract_strided_slice %12 {offsets = [0, 24], sizes = [16, 8], strides = [1, 1]} : vector<16x32xf32> to vector<16x8xf32>
    %cst_24 = arith.constant dense<0.000000e+00> : vector<16x16xf32>
    %64 = tpu.matmul %62, %63, %cst_24 {dimension_numbers = #tpu.dot_dimension_numbers<[1], [1], [0], [0], [0, 0, 1, 0], [], []>} : vector<16x8xf32>, vector<16x8xf32>, vector<16x16xf32> -> vector<16x16xf32>
    %cst_25 = arith.constant dense<0xFF800000> : vector<16xf32>
    %65 = vector.multi_reduction <maximumf>, %64, %cst_25 [1] : vector<16x16xf32> to vector<16xf32>
    %66 = vector.shape_cast %65 : vector<16xf32> to vector<16x1xf32>
    %67 = vector.broadcast %66 : vector<16x1xf32> to vector<16x16xf32>
    %68 = arith.subf %64, %67 : vector<16x16xf32>
    %69 = math.exp %68 : vector<16x16xf32>
    %cst_26 = arith.constant dense<0.000000e+00> : vector<16xf32>
    %70 = vector.multi_reduction <add>, %69, %cst_26 [1] : vector<16x16xf32> to vector<16xf32>
    %71 = vector.shape_cast %70 : vector<16xf32> to vector<16x1xf32>
    %72 = tpu.reciprocal %71 {approx = true} : vector<16x1xf32> -> vector<16x1xf32>
    %73 = vector.broadcast %72 : vector<16x1xf32> to vector<16x16xf32>
    %74 = arith.mulf %69, %73 : vector<16x16xf32>
    %75 = vector.extract_strided_slice %13 {offsets = [0, 24], sizes = [16, 8], strides = [1, 1]} : vector<16x32xf32> to vector<16x8xf32>
    %cst_27 = arith.constant dense<0.000000e+00> : vector<16x8xf32>
    %76 = tpu.matmul %74, %75, %cst_27 {dimension_numbers = #tpu.dot_dimension_numbers<[1], [0], [0], [1], [0, 0, 1, 1], [], []>} : vector<16x16xf32>, vector<16x8xf32>, vector<16x8xf32> -> vector<16x8xf32>
    %c0_28 = arith.constant 0 : index
    %c24 = arith.constant 24 : index
    %77 = vector.load %arg21[%c0_28, %c24] : memref<16x32xf32, #tpu.memory_space<vmem>>, vector<16x8xf32>
    tpu.vector_store %arg21[%c0_28, %c24], %76 {strides = array<i32>} : memref<16x32xf32, #tpu.memory_space<vmem>>, vector<16x8xf32>,
    %c0_29 = arith.constant 0 : index
    %c0_30 = arith.constant 0 : index
    %78 = vector.load %arg21[%c0_29, %c0_30] : memref<16x32xf32, #tpu.memory_space<vmem>>, vector<16x32xf32>
    %c0_31 = arith.constant 0 : index
    %c0_32 = arith.constant 0 : index
    %c0_33 = arith.constant 0 : index
    %79 = vector.load %arg7[%c0_31, %c0_32, %c0_33] : memref<1x32x32xf32, #tpu.memory_space<vmem>>, vector<1x32x32xf32>
    %80 = vector.shape_cast %79 : vector<1x32x32xf32> to vector<32x32xf32>
    %cst_34 = arith.constant dense<0.000000e+00> : vector<16x32xf32>
    %81 = tpu.matmul %78, %80, %cst_34 {dimension_numbers = #tpu.dot_dimension_numbers<[1], [0], [0], [1], [0, 0, 1, 1], [], []>} : vector<16x32xf32>, vector<32x32xf32>, vector<16x32xf32> -> vector<16x32xf32>
    %c0_35 = arith.constant 0 : index
    %c0_36 = arith.constant 0 : index
    %c0_37 = arith.constant 0 : index
    %82 = vector.load %arg8[%c0_35, %c0_36, %c0_37] : memref<1x1x32xf32, #tpu.memory_space<vmem>>, vector<1x1x32xf32>
    %83 = vector.shape_cast %82 : vector<1x1x32xf32> to vector<1x32xf32>
    %84 = vector.broadcast %83 : vector<1x32xf32> to vector<16x32xf32>
    %85 = arith.addf %81, %84 : vector<16x32xf32>
    %86 = arith.addf %3, %85 : vector<16x32xf32>
    %c0_38 = arith.constant 0 : index
    %c0_39 = arith.constant 0 : index
    %c0_40 = arith.constant 0 : index
    %87 = vector.load %arg13[%c0_38, %c0_39, %c0_40] : memref<1x1x32xf32, #tpu.memory_space<vmem>>, vector<1x1x32xf32>
    %88 = vector.shape_cast %87 : vector<1x1x32xf32> to vector<1x32xf32>
    %c0_41 = arith.constant 0 : index
    %c0_42 = arith.constant 0 : index
    %c0_43 = arith.constant 0 : index
    %89 = vector.load %arg14[%c0_41, %c0_42, %c0_43] : memref<1x1x32xf32, #tpu.memory_space<vmem>>, vector<1x1x32xf32>
    %90 = vector.shape_cast %89 : vector<1x1x32xf32> to vector<1x32xf32>
    %cst_44 = arith.constant dense<0.000000e+00> : vector<16xf32>
    %91 = vector.multi_reduction <add>, %86, %cst_44 [1] : vector<16x32xf32> to vector<16xf32>
    %92 = vector.shape_cast %91 : vector<16xf32> to vector<16x1xf32>
    %cst_45 = arith.constant 3.200000e+01 : f32
    %93 = vector.broadcast %cst_45 : f32 to vector<16x1xf32>
    %94 = arith.divf %92, %93 : vector<16x1xf32>
    %95 = vector.broadcast %94 : vector<16x1xf32> to vector<16x32xf32>
    %96 = arith.subf %86, %95 : vector<16x32xf32>
    %97 = arith.mulf %96, %96 : vector<16x32xf32>
    %cst_46 = arith.constant dense<0.000000e+00> : vector<16xf32>
    %98 = vector.multi_reduction <add>, %97, %cst_46 [1] : vector<16x32xf32> to vector<16xf32>
    %99 = vector.shape_cast %98 : vector<16xf32> to vector<16x1xf32>
    %cst_47 = arith.constant 3.200000e+01 : f32
    %100 = vector.broadcast %cst_47 : f32 to vector<16x1xf32>
    %101 = arith.divf %99, %100 : vector<16x1xf32>
    %102 = vector.broadcast %94 : vector<16x1xf32> to vector<16x32xf32>
    %103 = arith.subf %86, %102 : vector<16x32xf32>
    %cst_48 = arith.constant 9.99999974E-6 : f32
    %104 = vector.broadcast %cst_48 : f32 to vector<16x1xf32>
    %105 = arith.addf %101, %104 : vector<16x1xf32>
    %106 = math.rsqrt %105 : vector<16x1xf32>
    %107 = vector.broadcast %106 : vector<16x1xf32> to vector<16x32xf32>
    %108 = arith.mulf %103, %107 : vector<16x32xf32>
    %109 = vector.broadcast %88 : vector<1x32xf32> to vector<16x32xf32>
    %110 = arith.mulf %108, %109 : vector<16x32xf32>
    %111 = vector.broadcast %90 : vector<1x32xf32> to vector<16x32xf32>
    %112 = arith.addf %110, %111 : vector<16x32xf32>
    %c0_49 = arith.constant 0 : index
    %c0_50 = arith.constant 0 : index
    %c0_51 = arith.constant 0 : index
    %113 = vector.load %arg9[%c0_49, %c0_50, %c0_51] : memref<1x32x64xf32, #tpu.memory_space<vmem>>, vector<1x32x64xf32>
    %114 = vector.shape_cast %113 : vector<1x32x64xf32> to vector<32x64xf32>
    %cst_52 = arith.constant dense<0.000000e+00> : vector<16x64xf32>
    %115 = tpu.matmul %112, %114, %cst_52 {dimension_numbers = #tpu.dot_dimension_numbers<[1], [0], [0], [1], [0, 0, 1, 1], [], []>} : vector<16x32xf32>, vector<32x64xf32>, vector<16x64xf32> -> vector<16x64xf32>
    %c0_53 = arith.constant 0 : index
    %c0_54 = arith.constant 0 : index
    %c0_55 = arith.constant 0 : index
    %116 = vector.load %arg10[%c0_53, %c0_54, %c0_55] : memref<1x1x64xf32, #tpu.memory_space<vmem>>, vector<1x1x64xf32>
    %117 = vector.shape_cast %116 : vector<1x1x64xf32> to vector<1x64xf32>
    %118 = vector.broadcast %117 : vector<1x64xf32> to vector<16x64xf32>
    %119 = arith.addf %115, %118 : vector<16x64xf32>
    %cst_56 = arith.constant 0.000000e+00 : f32
    %120 = vector.broadcast %cst_56 : f32 to vector<16x64xf32>
    %121 = arith.maximumf %119, %120 : vector<16x64xf32>
    %c0_57 = arith.constant 0 : index
    %c0_58 = arith.constant 0 : index
    %c0_59 = arith.constant 0 : index
    %122 = vector.load %arg11[%c0_57, %c0_58, %c0_59] : memref<1x64x32xf32, #tpu.memory_space<vmem>>, vector<1x64x32xf32>
    %123 = vector.shape_cast %122 : vector<1x64x32xf32> to vector<64x32xf32>
    %cst_60 = arith.constant dense<0.000000e+00> : vector<16x32xf32>
    %124 = tpu.matmul %121, %123, %cst_60 {dimension_numbers = #tpu.dot_dimension_numbers<[1], [0], [0], [1], [0, 0, 1, 1], [], []>} : vector<16x64xf32>, vector<64x32xf32>, vector<16x32xf32> -> vector<16x32xf32>
    %c0_61 = arith.constant 0 : index
    %c0_62 = arith.constant 0 : index
    %c0_63 = arith.constant 0 : index
    %125 = vector.load %arg12[%c0_61, %c0_62, %c0_63] : memref<1x1x32xf32, #tpu.memory_space<vmem>>, vector<1x1x32xf32>
    %126 = vector.shape_cast %125 : vector<1x1x32xf32> to vector<1x32xf32>
    %127 = vector.broadcast %126 : vector<1x32xf32> to vector<16x32xf32>
    %128 = arith.addf %124, %127 : vector<16x32xf32>
    %129 = arith.addf %112, %128 : vector<16x32xf32>
    %c0_64 = arith.constant 0 : index
    %c0_65 = arith.constant 0 : index
    %c0_66 = arith.constant 0 : index
    %130 = vector.load %arg15[%c0_64, %c0_65, %c0_66] : memref<1x1x32xf32, #tpu.memory_space<vmem>>, vector<1x1x32xf32>
    %131 = vector.shape_cast %130 : vector<1x1x32xf32> to vector<1x32xf32>
    %c0_67 = arith.constant 0 : index
    %c0_68 = arith.constant 0 : index
    %c0_69 = arith.constant 0 : index
    %132 = vector.load %arg16[%c0_67, %c0_68, %c0_69] : memref<1x1x32xf32, #tpu.memory_space<vmem>>, vector<1x1x32xf32>
    %133 = vector.shape_cast %132 : vector<1x1x32xf32> to vector<1x32xf32>
    %cst_70 = arith.constant dense<0.000000e+00> : vector<16xf32>
    %134 = vector.multi_reduction <add>, %129, %cst_70 [1] : vector<16x32xf32> to vector<16xf32>
    %135 = vector.shape_cast %134 : vector<16xf32> to vector<16x1xf32>
    %cst_71 = arith.constant 3.200000e+01 : f32
    %136 = vector.broadcast %cst_71 : f32 to vector<16x1xf32>
    %137 = arith.divf %135, %136 : vector<16x1xf32>
    %138 = vector.broadcast %137 : vector<16x1xf32> to vector<16x32xf32>
    %139 = arith.subf %129, %138 : vector<16x32xf32>
    %140 = arith.mulf %139, %139 : vector<16x32xf32>
    %cst_72 = arith.constant dense<0.000000e+00> : vector<16xf32>
    %141 = vector.multi_reduction <add>, %140, %cst_72 [1] : vector<16x32xf32> to vector<16xf32>
    %142 = vector.shape_cast %141 : vector<16xf32> to vector<16x1xf32>
    %cst_73 = arith.constant 3.200000e+01 : f32
    %143 = vector.broadcast %cst_73 : f32 to vector<16x1xf32>
    %144 = arith.divf %142, %143 : vector<16x1xf32>
    %145 = vector.broadcast %137 : vector<16x1xf32> to vector<16x32xf32>
    %146 = arith.subf %129, %145 : vector<16x32xf32>
    %cst_74 = arith.constant 9.99999974E-6 : f32
    %147 = vector.broadcast %cst_74 : f32 to vector<16x1xf32>
    %148 = arith.addf %144, %147 : vector<16x1xf32>
    %149 = math.rsqrt %148 : vector<16x1xf32>
    %150 = vector.broadcast %149 : vector<16x1xf32> to vector<16x32xf32>
    %151 = arith.mulf %146, %150 : vector<16x32xf32>
    %152 = vector.broadcast %131 : vector<1x32xf32> to vector<16x32xf32>
    %153 = arith.mulf %151, %152 : vector<16x32xf32>
    %154 = vector.broadcast %133 : vector<1x32xf32> to vector<16x32xf32>
    %155 = arith.addf %153, %154 : vector<16x32xf32>
    %c0_75 = arith.constant 0 : index
    %c0_76 = arith.constant 0 : index
    %156 = vector.load %arg20[%c0_75, %c0_76] : memref<16x32xf32, #tpu.memory_space<vmem>>, vector<16x32xf32>
    tpu.vector_store %arg20[%c0_75, %c0_76], %155 {strides = array<i32>} : memref<16x32xf32, #tpu.memory_space<vmem>>, vector<16x32xf32>,
    %c1_i32 = arith.constant 1 : i32
    %157 = arith.cmpi eq, %arg1, %c1_i32 : i32
    %158 = arith.extui %157 : i1 to i32
    %c0_i32_77 = arith.constant 0 : i32
    %159 = arith.cmpi ne, %158, %c0_i32_77 : i32
    scf.if %159 {
      %c0_78 = arith.constant 0 : index
      %c0_79 = arith.constant 0 : index
      %160 = vector.load %arg17[%c0_78, %c0_79] : memref<1x32xf32, #tpu.memory_space<vmem>>, vector<1x32xf32>
      %c0_80 = arith.constant 0 : index
      %c0_81 = arith.constant 0 : index
      %161 = vector.load %arg18[%c0_80, %c0_81] : memref<1x32xf32, #tpu.memory_space<vmem>>, vector<1x32xf32>
      %cst_82 = arith.constant dense<0.000000e+00> : vector<16xf32>
      %162 = vector.multi_reduction <add>, %155, %cst_82 [1] : vector<16x32xf32> to vector<16xf32>
      %163 = vector.shape_cast %162 : vector<16xf32> to vector<16x1xf32>
      %cst_83 = arith.constant 3.200000e+01 : f32
      %164 = vector.broadcast %cst_83 : f32 to vector<16x1xf32>
      %165 = arith.divf %163, %164 : vector<16x1xf32>
      %166 = vector.broadcast %165 : vector<16x1xf32> to vector<16x32xf32>
      %167 = arith.subf %155, %166 : vector<16x32xf32>
      %168 = arith.mulf %167, %167 : vector<16x32xf32>
      %cst_84 = arith.constant dense<0.000000e+00> : vector<16xf32>
      %169 = vector.multi_reduction <add>, %168, %cst_84 [1] : vector<16x32xf32> to vector<16xf32>
      %170 = vector.shape_cast %169 : vector<16xf32> to vector<16x1xf32>
      %cst_85 = arith.constant 3.200000e+01 : f32
      %171 = vector.broadcast %cst_85 : f32 to vector<16x1xf32>
      %172 = arith.divf %170, %171 : vector<16x1xf32>
      %173 = vector.broadcast %165 : vector<16x1xf32> to vector<16x32xf32>
      %174 = arith.subf %155, %173 : vector<16x32xf32>
      %cst_86 = arith.constant 9.99999974E-6 : f32
      %175 = vector.broadcast %cst_86 : f32 to vector<16x1xf32>
      %176 = arith.addf %172, %175 : vector<16x1xf32>
      %177 = math.rsqrt %176 : vector<16x1xf32>
      %178 = vector.broadcast %177 : vector<16x1xf32> to vector<16x32xf32>
      %179 = arith.mulf %174, %178 : vector<16x32xf32>
      %180 = vector.broadcast %160 : vector<1x32xf32> to vector<16x32xf32>
      %181 = arith.mulf %179, %180 : vector<16x32xf32>
      %182 = vector.broadcast %161 : vector<1x32xf32> to vector<16x32xf32>
      %183 = arith.addf %181, %182 : vector<16x32xf32>
      %c0_87 = arith.constant 0 : index
      %c0_88 = arith.constant 0 : index
      %c0_89 = arith.constant 0 : index
      %184 = vector.load %arg19[%c0_87, %c0_88, %c0_89] : memref<1x16x32xf32, #tpu.memory_space<vmem>>, vector<1x16x32xf32>
      %185 = vector.shape_cast %184 : vector<1x16x32xf32> to vector<16x32xf32>
      %186 = vector.shape_cast %183 : vector<16x32xf32> to vector<1x16x32xf32>
      tpu.vector_store %arg19[%c0_87, %c0_88, %c0_89], %186 {strides = array<i32>} : memref<1x16x32xf32, #tpu.memory_space<vmem>>, vector<1x16x32xf32>,
    } else {
    }
    return
  }
  func.func @transform_0(%arg0: i32, %arg1: i32) -> (i32, i32, i32) {
    %c0_i32 = arith.constant 0 : i32
    %c0_i32_0 = arith.constant 0 : i32
    %c0_i32_1 = arith.constant 0 : i32
    return %arg0, %c0_i32, %c0_i32_0 : i32, i32, i32
  }
  func.func @transform_1(%arg0: i32, %arg1: i32) -> (i32, i32) {
    %c0_i32 = arith.constant 0 : i32
    %c0_i32_0 = arith.constant 0 : i32
    %c0_i32_1 = arith.constant 0 : i32
    return %c0_i32, %c0_i32_0 : i32, i32
  }
  func.func @transform_2(%arg0: i32, %arg1: i32) -> (i32, i32) {
    %c0_i32 = arith.constant 0 : i32
    %c0_i32_0 = arith.constant 0 : i32
    %c0_i32_1 = arith.constant 0 : i32
    return %c0_i32, %c0_i32_0 : i32, i32
  }
  func.func @transform_3(%arg0: i32, %arg1: i32) -> (i32, i32, i32) {
    %c0_i32 = arith.constant 0 : i32
    %c0_i32_0 = arith.constant 0 : i32
    %c0_i32_1 = arith.constant 0 : i32
    return %arg1, %c0_i32, %c0_i32_0 : i32, i32, i32
  }
  func.func @transform_4(%arg0: i32, %arg1: i32) -> (i32, i32, i32) {
    %c0_i32 = arith.constant 0 : i32
    %c0_i32_0 = arith.constant 0 : i32
    %c0_i32_1 = arith.constant 0 : i32
    return %arg1, %c0_i32, %c0_i32_0 : i32, i32, i32
  }
  func.func @transform_5(%arg0: i32, %arg1: i32) -> (i32, i32, i32) {
    %c0_i32 = arith.constant 0 : i32
    %c0_i32_0 = arith.constant 0 : i32
    %c0_i32_1 = arith.constant 0 : i32
    return %arg1, %c0_i32, %c0_i32_0 : i32, i32, i32
  }
  func.func @transform_6(%arg0: i32, %arg1: i32) -> (i32, i32, i32) {
    %c0_i32 = arith.constant 0 : i32
    %c0_i32_0 = arith.constant 0 : i32
    %c0_i32_1 = arith.constant 0 : i32
    return %arg1, %c0_i32, %c0_i32_0 : i32, i32, i32
  }
  func.func @transform_7(%arg0: i32, %arg1: i32) -> (i32, i32, i32) {
    %c0_i32 = arith.constant 0 : i32
    %c0_i32_0 = arith.constant 0 : i32
    %c0_i32_1 = arith.constant 0 : i32
    return %arg1, %c0_i32, %c0_i32_0 : i32, i32, i32
  }
  func.func @transform_8(%arg0: i32, %arg1: i32) -> (i32, i32, i32) {
    %c0_i32 = arith.constant 0 : i32
    %c0_i32_0 = arith.constant 0 : i32
    %c0_i32_1 = arith.constant 0 : i32
    return %arg1, %c0_i32, %c0_i32_0 : i32, i32, i32
  }
  func.func @transform_9(%arg0: i32, %arg1: i32) -> (i32, i32, i32) {
    %c0_i32 = arith.constant 0 : i32
    %c0_i32_0 = arith.constant 0 : i32
    %c0_i32_1 = arith.constant 0 : i32
    return %arg1, %c0_i32, %c0_i32_0 : i32, i32, i32
  }
  func.func @transform_10(%arg0: i32, %arg1: i32) -> (i32, i32, i32) {
    %c0_i32 = arith.constant 0 : i32
    %c0_i32_0 = arith.constant 0 : i32
    %c0_i32_1 = arith.constant 0 : i32
    return %arg1, %c0_i32, %c0_i32_0 : i32, i32, i32
  }
  func.func @transform_11(%arg0: i32, %arg1: i32) -> (i32, i32, i32) {
    %c0_i32 = arith.constant 0 : i32
    %c0_i32_0 = arith.constant 0 : i32
    %c0_i32_1 = arith.constant 0 : i32
    return %arg1, %c0_i32, %c0_i32_0 : i32, i32, i32
  }
  func.func @transform_12(%arg0: i32, %arg1: i32) -> (i32, i32, i32) {
    %c0_i32 = arith.constant 0 : i32
    %c0_i32_0 = arith.constant 0 : i32
    %c0_i32_1 = arith.constant 0 : i32
    return %arg1, %c0_i32, %c0_i32_0 : i32, i32, i32
  }
  func.func @transform_13(%arg0: i32, %arg1: i32) -> (i32, i32, i32) {
    %c0_i32 = arith.constant 0 : i32
    %c0_i32_0 = arith.constant 0 : i32
    %c0_i32_1 = arith.constant 0 : i32
    return %arg1, %c0_i32, %c0_i32_0 : i32, i32, i32
  }
  func.func @transform_14(%arg0: i32, %arg1: i32) -> (i32, i32, i32) {
    %c0_i32 = arith.constant 0 : i32
    %c0_i32_0 = arith.constant 0 : i32
    %c0_i32_1 = arith.constant 0 : i32
    return %arg1, %c0_i32, %c0_i32_0 : i32, i32, i32
  }
  func.func @transform_15(%arg0: i32, %arg1: i32) -> (i32, i32) {
    %c0_i32 = arith.constant 0 : i32
    %c0_i32_0 = arith.constant 0 : i32
    %c0_i32_1 = arith.constant 0 : i32
    return %c0_i32, %c0_i32_0 : i32, i32
  }
  func.func @transform_16(%arg0: i32, %arg1: i32) -> (i32, i32) {
    %c0_i32 = arith.constant 0 : i32
    %c0_i32_0 = arith.constant 0 : i32
    %c0_i32_1 = arith.constant 0 : i32
    return %c0_i32, %c0_i32_0 : i32, i32
  }
  func.func @transform_17(%arg0: i32, %arg1: i32) -> (i32, i32, i32) {
    %c0_i32 = arith.constant 0 : i32
    %c0_i32_0 = arith.constant 0 : i32
    %c0_i32_1 = arith.constant 0 : i32
    return %arg0, %c0_i32, %c0_i32_0 : i32, i32, i32
  }
}

</mosaic_0001>

<llo_original>
// kernel: da_transformer_forward.1
$region0: #{da_transformer_forward.1}
  #allocation0 [shape = 'u32[]', space=smem, size = 0x4, offset = 0x4, fixed_abs, tag = 'smem constant byte address 0x4 - core index']
  #allocation1 [shape = 'u32[72,128]{1,0:T(1,128)}', space=vmem, size = 0x9000, scoped, tag = 'internal scratch']
  #allocation2 [shape = 'f32[16,32]{1,0:T(8,128)}', space=vmem, size = 0x2000, scoped, tag = 'scratch operand']
  #allocation3 [shape = 'f32[16,32]{1,0:T(8,128)}', space=vmem, size = 0x2000, scoped, tag = 'scratch operand']
  %s0 = inlined_call_operand.vmem [shape: f32[2,16,8], index: 0, kind: input, shape index: {}]
  %s1 = inlined_call_operand.vmem [shape: f32[8,32], index: 1, kind: input, shape index: {}]
  %s2 = inlined_call_operand.vmem [shape: f32[1,32], index: 2, kind: input, shape index: {}]
  %s3 = inlined_call_operand.vmem [shape: f32[2,32,96], index: 3, kind: input, shape index: {}]
  %s4 = inlined_call_operand.vmem [shape: f32[2,1,96], index: 4, kind: input, shape index: {}]
  %s5 = inlined_call_operand.vmem [shape: f32[2,32,32], index: 5, kind: input, shape index: {}]
  %s6 = inlined_call_operand.vmem [shape: f32[2,1,32], index: 6, kind: input, shape index: {}]
  %s7 = inlined_call_operand.vmem [shape: f32[2,32,64], index: 7, kind: input, shape index: {}]
  %s8 = inlined_call_operand.vmem [shape: f32[2,1,64], index: 8, kind: input, shape index: {}]
  %s9 = inlined_call_operand.vmem [shape: f32[2,64,32], index: 9, kind: input, shape index: {}]
  %s10 = inlined_call_operand.vmem [shape: f32[2,1,32], index: 10, kind: input, shape index: {}]
  %s11 = inlined_call_operand.vmem [shape: f32[2,1,32], index: 11, kind: input, shape index: {}]
  %s12 = inlined_call_operand.vmem [shape: f32[2,1,32], index: 12, kind: input, shape index: {}]
  %s13 = inlined_call_operand.vmem [shape: f32[2,1,32], index: 13, kind: input, shape index: {}]
  %s14 = inlined_call_operand.vmem [shape: f32[2,1,32], index: 14, kind: input, shape index: {}]
  %s15 = inlined_call_operand.vmem [shape: f32[1,32], index: 15, kind: input, shape index: {}]
  %s16 = inlined_call_operand.vmem [shape: f32[1,32], index: 16, kind: input, shape index: {}]
  %s17 = inlined_call_operand.hbm [shape: f32[2,16,32], index: 17, kind: output, shape index: {}]
  %s18 = sld [smem:[#allocation0]]
  $region109: #{da_transformer_forward.1} parent=0
    _
  %s20 = ssub.s32 1, %s18
  %s21 = scalar_select 0, %s20, %s18
  $region1: #{da_transformer_forward.1} parent=0
    #allocation4 [shape = 'u8[16384]{0}', space=vmem, size = 0x4000, scoped, tag = 'output window, operand 0']
    #allocation5 [shape = 's32[2]{0}', space=sflag, size = 0x8, scoped, tag = 'scoped memory for da_transformer_forward.1']
    %22 = vsyncpa [#allocation5], 0
    %s23 = scalar_lea.sflag [#allocation5], 1
    %24 = vsyncpa %s23, 0
    loop: start=0, step=1, limit=6
    $region2: #{da_transformer_forward.1} parent=1 // loop_pre_header
      _
    $region3: #{da_transformer_forward.1} parent=1 // loop_header
      %s26 = sphi 0, %s30
      %p27 = scmp.ge.s32.totalorder %s26, 6
      %s33 = sphi 0, %s45
      %s34 = sphi 0, %s41
      %s35 = sphi 0, %s33
      %s36 = sphi 0, %s34
      %s37 = sphi 0, %s35
      %s38 = sphi 0, %s36
      %s48 = sphi 0, %s50
      %s51 = sphi 0, %s48
      %s52 = sphi 0, %s51
      %s68 = sphi 0, %s52
      %s72 = sphi 0, %s72
      %s74 = sphi 0, %s72
      %s75 = sphi 0, %s74
      %s89 = sphi 0, %s75
      %s93 = sphi 0, %s93
      %s95 = sphi 0, %s93
      %s96 = sphi 0, %s95
      %s110 = sphi 0, %s96
      %s116 = sphi 0, %s118
      %s119 = sphi 0, %s116
      %s120 = sphi 0, %s119
      %s136 = sphi 0, %s120
      %s142 = sphi 0, %s144
      %s145 = sphi 0, %s142
      %s146 = sphi 0, %s145
      %s162 = sphi 0, %s146
      %s168 = sphi 0, %s170
      %s171 = sphi 0, %s168
      %s172 = sphi 0, %s171
      %s188 = sphi 0, %s172
      %s194 = sphi 0, %s196
      %s197 = sphi 0, %s194
      %s198 = sphi 0, %s197
      %s214 = sphi 0, %s198
      %s220 = sphi 0, %s222
      %s223 = sphi 0, %s220
      %s224 = sphi 0, %s223
      %s240 = sphi 0, %s224
      %s246 = sphi 0, %s248
      %s249 = sphi 0, %s246
      %s250 = sphi 0, %s249
      %s266 = sphi 0, %s250
      %s272 = sphi 0, %s274
      %s275 = sphi 0, %s272
      %s276 = sphi 0, %s275
      %s292 = sphi 0, %s276
      %s298 = sphi 0, %s300
      %s301 = sphi 0, %s298
      %s302 = sphi 0, %s301
      %s318 = sphi 0, %s302
      %s324 = sphi 0, %s326
      %s327 = sphi 0, %s324
      %s328 = sphi 0, %s327
      %s344 = sphi 0, %s328
      %s350 = sphi 0, %s352
      %s353 = sphi 0, %s350
      %s354 = sphi 0, %s353
      %s370 = sphi 0, %s354
      %s376 = sphi 0, %s378
      %s379 = sphi 0, %s376
      %s380 = sphi 0, %s379
      %s396 = sphi 0, %s380
      %s402 = sphi 0, %s404
      %s405 = sphi 0, %s402
      %s406 = sphi 0, %s405
      %s422 = sphi 0, %s406
      %s426 = sphi 0, %s426
      %s428 = sphi 0, %s426
      %s429 = sphi 0, %s428
      %s443 = sphi 0, %s429
      %s447 = sphi 0, %s447
      %s449 = sphi 0, %s447
      %s450 = sphi 0, %s449
      %s464 = sphi 0, %s450
      %s470 = sphi 0, %s472
      %s473 = sphi 0, %s470
      %s474 = sphi 0, %s473
      %s490 = sphi 0, %s474
    $region4: #{da_transformer_forward.1} parent=1 // loop_header_branch
      %29 = sbr.rel (%p27) target = $region8
    $region5: #{da_transformer_forward.1} parent=1 // loop_body
      %s31 = ssub.s32 %s26, 1
      %s32 = ssub.s32 %s26, 2
      %s39 = sadd.s32 1, %s34
      %p40 = scmp.ge.s32.totalorder %s39, 2
      %s41 = scalar_select %p40, 0, %s39
      %s42 = sadd.s32 1, %s33
      %s43 = scalar_select %p40, %s42, %s33
      %p44 = scmp.ge.s32.totalorder %s43, 2
      %s45 = scalar_select %p44, 0, %s43
      %s46 = ssub.s32 %s33, %s45
      %p47 = scmp.eq.s32.totalorder %s46, 0
      %s49 = sadd.s32 %s48, 1
      %s50 = scalar_select %p47, %s48, %s49
      %p53 = pneg %p47
      %p54 = scmp.eq.s32.totalorder %s26, 3
      %p55 = por %p53, %p54
      %p56 = scmp.ne.s32.totalorder %s48, %s51
      %p57 = scmp.eq.s32.totalorder %s26, 0
      %p58 = por %p56, %p57
      %p59 = scmp.ne.s32.totalorder %s48, %s51
      %p60 = scmp.eq.s32.totalorder %s31, 3
      %p61 = por %p59, %p60
      %p62 = scmp.ne.s32.totalorder %s51, %s52
      %p63 = scmp.eq.s32.totalorder %s31, 0
      %p64 = por %p62, %p63
      %p65 = scmp.ne.s32.totalorder %s51, %s52
      %p66 = scmp.eq.s32.totalorder %s32, 3
      %p67 = por %p65, %p66
      %p69 = scmp.ne.s32.totalorder %s52, %s68
      %p70 = scmp.eq.s32.totalorder %s32, 0
      %p71 = por %p69, %p70
      %s73 = sadd.s32 %s72, 1
      %p76 = scmp.eq.s32.totalorder %s26, 3
      %p77 = scmp.ne.s32.totalorder %s72, %s74
      %p78 = scmp.eq.s32.totalorder %s26, 0
      %p79 = por %p77, %p78
      %p80 = scmp.ne.s32.totalorder %s72, %s74
      %p81 = scmp.eq.s32.totalorder %s31, 3
      %p82 = por %p80, %p81
      %p83 = scmp.ne.s32.totalorder %s74, %s75
      %p84 = scmp.eq.s32.totalorder %s31, 0
      %p85 = por %p83, %p84
      %p86 = scmp.ne.s32.totalorder %s74, %s75
      %p87 = scmp.eq.s32.totalorder %s32, 3
      %p88 = por %p86, %p87
      %p90 = scmp.ne.s32.totalorder %s75, %s89
      %p91 = scmp.eq.s32.totalorder %s32, 0
      %p92 = por %p90, %p91
      %s94 = sadd.s32 %s93, 1
      %p97 = scmp.eq.s32.totalorder %s26, 3
      %p98 = scmp.ne.s32.totalorder %s93, %s95
      %p99 = scmp.eq.s32.totalorder %s26, 0
      %p100 = por %p98, %p99
      %p101 = scmp.ne.s32.totalorder %s93, %s95
      %p102 = scmp.eq.s32.totalorder %s31, 3
      %p103 = por %p101, %p102
      %p104 = scmp.ne.s32.totalorder %s95, %s96
      %p105 = scmp.eq.s32.totalorder %s31, 0
      %p106 = por %p104, %p105
      %p107 = scmp.ne.s32.totalorder %s95, %s96
      %p108 = scmp.eq.s32.totalorder %s32, 3
      %p109 = por %p107, %p108
      %p111 = scmp.ne.s32.totalorder %s96, %s110
      %p112 = scmp.eq.s32.totalorder %s32, 0
      %p113 = por %p111, %p112
      %s114 = ssub.s32 %s34, %s41
      %p115 = scmp.eq.s32.totalorder %s114, 0
      %s117 = sadd.s32 %s116, 1
      %s118 = scalar_select %p115, %s116, %s117
      %p121 = pneg %p115
      %p122 = scmp.eq.s32.totalorder %s26, 3
      %p123 = por %p121, %p122
      %p124 = scmp.ne.s32.totalorder %s116, %s119
      %p125 = scmp.eq.s32.totalorder %s26, 0
      %p126 = por %p124, %p125
      %p127 = scmp.ne.s32.totalorder %s116, %s119
      %p128 = scmp.eq.s32.totalorder %s31, 3
      %p129 = por %p127, %p128
      %p130 = scmp.ne.s32.totalorder %s119, %s120
      %p131 = scmp.eq.s32.totalorder %s31, 0
      %p132 = por %p130, %p131
      %p133 = scmp.ne.s32.totalorder %s119, %s120
      %p134 = scmp.eq.s32.totalorder %s32, 3
      %p135 = por %p133, %p134
      %p137 = scmp.ne.s32.totalorder %s120, %s136
      %p138 = scmp.eq.s32.totalorder %s32, 0
      %p139 = por %p137, %p138
      %s140 = ssub.s32 %s34, %s41
      %p141 = scmp.eq.s32.totalorder %s140, 0
      %s143 = sadd.s32 %s142, 1
      %s144 = scalar_select %p141, %s142, %s143
      %p147 = pneg %p141
      %p148 = scmp.eq.s32.totalorder %s26, 3
      %p149 = por %p147, %p148
      %p150 = scmp.ne.s32.totalorder %s142, %s145
      %p151 = scmp.eq.s32.totalorder %s26, 0
      %p152 = por %p150, %p151
      %p153 = scmp.ne.s32.totalorder %s142, %s145
      %p154 = scmp.eq.s32.totalorder %s31, 3
      %p155 = por %p153, %p154
      %p156 = scmp.ne.s32.totalorder %s145, %s146
      %p157 = scmp.eq.s32.totalorder %s31, 0
      %p158 = por %p156, %p157
      %p159 = scmp.ne.s32.totalorder %s145, %s146
      %p160 = scmp.eq.s32.totalorder %s32, 3
      %p161 = por %p159, %p160
      %p163 = scmp.ne.s32.totalorder %s146, %s162
      %p164 = scmp.eq.s32.totalorder %s32, 0
      %p165 = por %p163, %p164
      %s166 = ssub.s32 %s34, %s41
      %p167 = scmp.eq.s32.totalorder %s166, 0
      %s169 = sadd.s32 %s168, 1
      %s170 = scalar_select %p167, %s168, %s169
      %p173 = pneg %p167
      %p174 = scmp.eq.s32.totalorder %s26, 3
      %p175 = por %p173, %p174
      %p176 = scmp.ne.s32.totalorder %s168, %s171
      %p177 = scmp.eq.s32.totalorder %s26, 0
      %p178 = por %p176, %p177
      %p179 = scmp.ne.s32.totalorder %s168, %s171
      %p180 = scmp.eq.s32.totalorder %s31, 3
      %p181 = por %p179, %p180
      %p182 = scmp.ne.s32.totalorder %s171, %s172
      %p183 = scmp.eq.s32.totalorder %s31, 0
      %p184 = por %p182, %p183
      %p185 = scmp.ne.s32.totalorder %s171, %s172
      %p186 = scmp.eq.s32.totalorder %s32, 3
      %p187 = por %p185, %p186
      %p189 = scmp.ne.s32.totalorder %s172, %s188
      %p190 = scmp.eq.s32.totalorder %s32, 0
      %p191 = por %p189, %p190
      %s192 = ssub.s32 %s34, %s41
      %p193 = scmp.eq.s32.totalorder %s192, 0
      %s195 = sadd.s32 %s194, 1
      %s196 = scalar_select %p193, %s194, %s195
      %p199 = pneg %p193
      %p200 = scmp.eq.s32.totalorder %s26, 3
      %p201 = por %p199, %p200
      %p202 = scmp.ne.s32.totalorder %s194, %s197
      %p203 = scmp.eq.s32.totalorder %s26, 0
      %p204 = por %p202, %p203
      %p205 = scmp.ne.s32.totalorder %s194, %s197
      %p206 = scmp.eq.s32.totalorder %s31, 3
      %p207 = por %p205, %p206
      %p208 = scmp.ne.s32.totalorder %s197, %s198
      %p209 = scmp.eq.s32.totalorder %s31, 0
      %p210 = por %p208, %p209
      %p211 = scmp.ne.s32.totalorder %s197, %s198
      %p212 = scmp.eq.s32.totalorder %s32, 3
      %p213 = por %p211, %p212
      %p215 = scmp.ne.s32.totalorder %s198, %s214
      %p216 = scmp.eq.s32.totalorder %s32, 0
      %p217 = por %p215, %p216
      %s218 = ssub.s32 %s34, %s41
      %p219 = scmp.eq.s32.totalorder %s218, 0
      %s221 = sadd.s32 %s220, 1
      %s222 = scalar_select %p219, %s220, %s221
      %p225 = pneg %p219
      %p226 = scmp.eq.s32.totalorder %s26, 3
      %p227 = por %p225, %p226
      %p228 = scmp.ne.s32.totalorder %s220, %s223
      %p229 = scmp.eq.s32.totalorder %s26, 0
      %p230 = por %p228, %p229
      %p231 = scmp.ne.s32.totalorder %s220, %s223
      %p232 = scmp.eq.s32.totalorder %s31, 3
      %p233 = por %p231, %p232
      %p234 = scmp.ne.s32.totalorder %s223, %s224
      %p235 = scmp.eq.s32.totalorder %s31, 0
      %p236 = por %p234, %p235
      %p237 = scmp.ne.s32.totalorder %s223, %s224
      %p238 = scmp.eq.s32.totalorder %s32, 3
      %p239 = por %p237, %p238
      %p241 = scmp.ne.s32.totalorder %s224, %s240
      %p242 = scmp.eq.s32.totalorder %s32, 0
      %p243 = por %p241, %p242
      %s244 = ssub.s32 %s34, %s41
      %p245 = scmp.eq.s32.totalorder %s244, 0
      %s247 = sadd.s32 %s246, 1
      %s248 = scalar_select %p245, %s246, %s247
      %p251 = pneg %p245
      %p252 = scmp.eq.s32.totalorder %s26, 3
      %p253 = por %p251, %p252
      %p254 = scmp.ne.s32.totalorder %s246, %s249
      %p255 = scmp.eq.s32.totalorder %s26, 0
      %p256 = por %p254, %p255
      %p257 = scmp.ne.s32.totalorder %s246, %s249
      %p258 = scmp.eq.s32.totalorder %s31, 3
      %p259 = por %p257, %p258
      %p260 = scmp.ne.s32.totalorder %s249, %s250
      %p261 = scmp.eq.s32.totalorder %s31, 0
      %p262 = por %p260, %p261
      %p263 = scmp.ne.s32.totalorder %s249, %s250
      %p264 = scmp.eq.s32.totalorder %s32, 3
      %p265 = por %p263, %p264
      %p267 = scmp.ne.s32.totalorder %s250, %s266
      %p268 = scmp.eq.s32.totalorder %s32, 0
      %p269 = por %p267, %p268
      %s270 = ssub.s32 %s34, %s41
      %p271 = scmp.eq.s32.totalorder %s270, 0
      %s273 = sadd.s32 %s272, 1
      %s274 = scalar_select %p271, %s272, %s273
      %p277 = pneg %p271
      %p278 = scmp.eq.s32.totalorder %s26, 3
      %p279 = por %p277, %p278
      %p280 = scmp.ne.s32.totalorder %s272, %s275
      %p281 = scmp.eq.s32.totalorder %s26, 0
      %p282 = por %p280, %p281
      %p283 = scmp.ne.s32.totalorder %s272, %s275
      %p284 = scmp.eq.s32.totalorder %s31, 3
      %p285 = por %p283, %p284
      %p286 = scmp.ne.s32.totalorder %s275, %s276
      %p287 = scmp.eq.s32.totalorder %s31, 0
      %p288 = por %p286, %p287
      %p289 = scmp.ne.s32.totalorder %s275, %s276
      %p290 = scmp.eq.s32.totalorder %s32, 3
      %p291 = por %p289, %p290
      %p293 = scmp.ne.s32.totalorder %s276, %s292
      %p294 = scmp.eq.s32.totalorder %s32, 0
      %p295 = por %p293, %p294
      %s296 = ssub.s32 %s34, %s41
      %p297 = scmp.eq.s32.totalorder %s296, 0
      %s299 = sadd.s32 %s298, 1
      %s300 = scalar_select %p297, %s298, %s299
      %p303 = pneg %p297
      %p304 = scmp.eq.s32.totalorder %s26, 3
      %p305 = por %p303, %p304
      %p306 = scmp.ne.s32.totalorder %s298, %s301
      %p307 = scmp.eq.s32.totalorder %s26, 0
      %p308 = por %p306, %p307
      %p309 = scmp.ne.s32.totalorder %s298, %s301
      %p310 = scmp.eq.s32.totalorder %s31, 3
      %p311 = por %p309, %p310
      %p312 = scmp.ne.s32.totalorder %s301, %s302
      %p313 = scmp.eq.s32.totalorder %s31, 0
      %p314 = por %p312, %p313
      %p315 = scmp.ne.s32.totalorder %s301, %s302
      %p316 = scmp.eq.s32.totalorder %s32, 3
      %p317 = por %p315, %p316
      %p319 = scmp.ne.s32.totalorder %s302, %s318
      %p320 = scmp.eq.s32.totalorder %s32, 0
      %p321 = por %p319, %p320
      %s322 = ssub.s32 %s34, %s41
      %p323 = scmp.eq.s32.totalorder %s322, 0
      %s325 = sadd.s32 %s324, 1
      %s326 = scalar_select %p323, %s324, %s325
      %p329 = pneg %p323
      %p330 = scmp.eq.s32.totalorder %s26, 3
      %p331 = por %p329, %p330
      %p332 = scmp.ne.s32.totalorder %s324, %s327
      %p333 = scmp.eq.s32.totalorder %s26, 0
      %p334 = por %p332, %p333
      %p335 = scmp.ne.s32.totalorder %s324, %s327
      %p336 = scmp.eq.s32.totalorder %s31, 3
      %p337 = por %p335, %p336
      %p338 = scmp.ne.s32.totalorder %s327, %s328
      %p339 = scmp.eq.s32.totalorder %s31, 0
      %p340 = por %p338, %p339
      %p341 = scmp.ne.s32.totalorder %s327, %s328
      %p342 = scmp.eq.s32.totalorder %s32, 3
      %p343 = por %p341, %p342
      %p345 = scmp.ne.s32.totalorder %s328, %s344
      %p346 = scmp.eq.s32.totalorder %s32, 0
      %p347 = por %p345, %p346
      %s348 = ssub.s32 %s34, %s41
      %p349 = scmp.eq.s32.totalorder %s348, 0
      %s351 = sadd.s32 %s350, 1
      %s352 = scalar_select %p349, %s350, %s351
      %p355 = pneg %p349
      %p356 = scmp.eq.s32.totalorder %s26, 3
      %p357 = por %p355, %p356
      %p358 = scmp.ne.s32.totalorder %s350, %s353
      %p359 = scmp.eq.s32.totalorder %s26, 0
      %p360 = por %p358, %p359
      %p361 = scmp.ne.s32.totalorder %s350, %s353
      %p362 = scmp.eq.s32.totalorder %s31, 3
      %p363 = por %p361, %p362
      %p364 = scmp.ne.s32.totalorder %s353, %s354
      %p365 = scmp.eq.s32.totalorder %s31, 0
      %p366 = por %p364, %p365
      %p367 = scmp.ne.s32.totalorder %s353, %s354
      %p368 = scmp.eq.s32.totalorder %s32, 3
      %p369 = por %p367, %p368
      %p371 = scmp.ne.s32.totalorder %s354, %s370
      %p372 = scmp.eq.s32.totalorder %s32, 0
      %p373 = por %p371, %p372
      %s374 = ssub.s32 %s34, %s41
      %p375 = scmp.eq.s32.totalorder %s374, 0
      %s377 = sadd.s32 %s376, 1
      %s378 = scalar_select %p375, %s376, %s377
      %p381 = pneg %p375
      %p382 = scmp.eq.s32.totalorder %s26, 3
      %p383 = por %p381, %p382
      %p384 = scmp.ne.s32.totalorder %s376, %s379
      %p385 = scmp.eq.s32.totalorder %s26, 0
      %p386 = por %p384, %p385
      %p387 = scmp.ne.s32.totalorder %s376, %s379
      %p388 = scmp.eq.s32.totalorder %s31, 3
      %p389 = por %p387, %p388
      %p390 = scmp.ne.s32.totalorder %s379, %s380
      %p391 = scmp.eq.s32.totalorder %s31, 0
      %p392 = por %p390, %p391
      %p393 = scmp.ne.s32.totalorder %s379, %s380
      %p394 = scmp.eq.s32.totalorder %s32, 3
      %p395 = por %p393, %p394
      %p397 = scmp.ne.s32.totalorder %s380, %s396
      %p398 = scmp.eq.s32.totalorder %s32, 0
      %p399 = por %p397, %p398
      %s400 = ssub.s32 %s34, %s41
      %p401 = scmp.eq.s32.totalorder %s400, 0
      %s403 = sadd.s32 %s402, 1
      %s404 = scalar_select %p401, %s402, %s403
      %p407 = pneg %p401
      %p408 = scmp.eq.s32.totalorder %s26, 3
      %p409 = por %p407, %p408
      %p410 = scmp.ne.s32.totalorder %s402, %s405
      %p411 = scmp.eq.s32.totalorder %s26, 0
      %p412 = por %p410, %p411
      %p413 = scmp.ne.s32.totalorder %s402, %s405
      %p414 = scmp.eq.s32.totalorder %s31, 3
      %p415 = por %p413, %p414
      %p416 = scmp.ne.s32.totalorder %s405, %s406
      %p417 = scmp.eq.s32.totalorder %s31, 0
      %p418 = por %p416, %p417
      %p419 = scmp.ne.s32.totalorder %s405, %s406
      %p420 = scmp.eq.s32.totalorder %s32, 3
      %p421 = por %p419, %p420
      %p423 = scmp.ne.s32.totalorder %s406, %s422
      %p424 = scmp.eq.s32.totalorder %s32, 0
      %p425 = por %p423, %p424
      %s427 = sadd.s32 %s426, 1
      %p430 = scmp.eq.s32.totalorder %s26, 3
      %p431 = scmp.ne.s32.totalorder %s426, %s428
      %p432 = scmp.eq.s32.totalorder %s26, 0
      %p433 = por %p431, %p432
      %p434 = scmp.ne.s32.totalorder %s426, %s428
      %p435 = scmp.eq.s32.totalorder %s31, 3
      %p436 = por %p434, %p435
      %p437 = scmp.ne.s32.totalorder %s428, %s429
      %p438 = scmp.eq.s32.totalorder %s31, 0
      %p439 = por %p437, %p438
      %p440 = scmp.ne.s32.totalorder %s428, %s429
      %p441 = scmp.eq.s32.totalorder %s32, 3
      %p442 = por %p440, %p441
      %p444 = scmp.ne.s32.totalorder %s429, %s443
      %p445 = scmp.eq.s32.totalorder %s32, 0
      %p446 = por %p444, %p445
      %s448 = sadd.s32 %s447, 1
      %p451 = scmp.eq.s32.totalorder %s26, 3
      %p452 = scmp.ne.s32.totalorder %s447, %s449
      %p453 = scmp.eq.s32.totalorder %s26, 0
      %p454 = por %p452, %p453
      %p455 = scmp.ne.s32.totalorder %s447, %s449
      %p456 = scmp.eq.s32.totalorder %s31, 3
      %p457 = por %p455, %p456
      %p458 = scmp.ne.s32.totalorder %s449, %s450
      %p459 = scmp.eq.s32.totalorder %s31, 0
      %p460 = por %p458, %p459
      %p461 = scmp.ne.s32.totalorder %s449, %s450
      %p462 = scmp.eq.s32.totalorder %s32, 3
      %p463 = por %p461, %p462
      %p465 = scmp.ne.s32.totalorder %s450, %s464
      %p466 = scmp.eq.s32.totalorder %s32, 0
      %p467 = por %p465, %p466
      %s468 = ssub.s32 %s33, %s45
      %p469 = scmp.eq.s32.totalorder %s468, 0
      %s471 = sadd.s32 %s470, 1
      %s472 = scalar_select %p469, %s470, %s471
      %p475 = pneg %p469
      %p476 = scmp.eq.s32.totalorder %s26, 3
      %p477 = por %p475, %p476
      %p478 = scmp.ne.s32.totalorder %s470, %s473
      %p479 = scmp.eq.s32.totalorder %s26, 0
      %p480 = por %p478, %p479
      %p481 = scmp.ne.s32.totalorder %s470, %s473
      %p482 = scmp.eq.s32.totalorder %s31, 3
      %p483 = por %p481, %p482
      %p484 = scmp.ne.s32.totalorder %s473, %s474
      %p485 = scmp.eq.s32.totalorder %s31, 0
      %p486 = por %p484, %p485
      %p487 = scmp.ne.s32.totalorder %s473, %s474
      %p488 = scmp.eq.s32.totalorder %s32, 3
      %p489 = por %p487, %p488
      %p491 = scmp.ne.s32.totalorder %s474, %s490
      %p492 = scmp.eq.s32.totalorder %s32, 0
      %p493 = por %p491, %p492
      %p494 = scmp.le.s32.totalorder 1, %s26
      %p495 = scmp.lt.s32.totalorder %s26, 5
      %p496 = pnand %p494, %p495
      %p497 = pneg %p496
      // Predicated region
      $region9: #{da_transformer_forward.1} parent=5 // pred_check
        _
      $region10: #{da_transformer_forward.1} parent=5 // pred_check_branch
        %499 = sbr.rel (%p496) target = $region12
      $region11: #{da_transformer_forward.1} parent=5 // pred_region
        %s500 = ssub.s32 %s26, 1
        // Predicated region
        $region13: #{da_transformer_forward.1} parent=11 // pred_check
          %p501 = pneg %p85
        $region14: #{da_transformer_forward.1} parent=11 // pred_check_branch
          %503 = sbr.rel (%p501) target = $region16
        $region15: #{da_transformer_forward.1} parent=11 // pred_region
          _
        $region16: #{da_transformer_forward.1} parent=11 // pred_fallthru
          _
        // Predicated region
        $region17: #{da_transformer_forward.1} parent=11 // pred_check
          %p504 = pneg %p106
        $region18: #{da_transformer_forward.1} parent=11 // pred_check_branch
          %506 = sbr.rel (%p504) target = $region20
        $region19: #{da_transformer_forward.1} parent=11 // pred_region
          _
        $region20: #{da_transformer_forward.1} parent=11 // pred_fallthru
          _
        // Predicated region
        $region21: #{da_transformer_forward.1} parent=11 // pred_check
          %p507 = pneg %p439
        $region22: #{da_transformer_forward.1} parent=11 // pred_check_branch
          %509 = sbr.rel (%p507) target = $region24
        $region23: #{da_transformer_forward.1} parent=11 // pred_region
          _
        $region24: #{da_transformer_forward.1} parent=11 // pred_fallthru
          _
        // Predicated region
        $region25: #{da_transformer_forward.1} parent=11 // pred_check
          %p510 = pneg %p460
        $region26: #{da_transformer_forward.1} parent=11 // pred_check_branch
          %512 = sbr.rel (%p510) target = $region28
        $region27: #{da_transformer_forward.1} parent=11 // pred_region
          _
        $region28: #{da_transformer_forward.1} parent=11 // pred_fallthru
          _
      $region12: #{da_transformer_forward.1} parent=5 // pred_fallthru
        _
      %p513 = scmp.lt.s32.totalorder %s26, 4
      // Predicated region
      $region29: #{da_transformer_forward.1} parent=5 // pred_check
        %p514 = pneg %p513
      $region30: #{da_transformer_forward.1} parent=5 // pred_check_branch
        %516 = sbr.rel (%p514) target = $region32
      $region31: #{da_transformer_forward.1} parent=5 // pred_region
        // Predicated region
        $region33: #{da_transformer_forward.1} parent=31 // pred_check
          %p517 = pneg %p58
        $region34: #{da_transformer_forward.1} parent=31 // pred_check_branch
          %519 = sbr.rel (%p517) target = $region36
        $region35: #{da_transformer_forward.1} parent=31 // pred_region
          %p520 = scmp.lt.s32.totalorder %s33, 1
          %s521 = scalar_select %p520, %s33, 1
          %s522 = smul.addr %s521, 2
          %s523 = smul.addr %s522, 8
          %s524 = scalar_lea.vmem %s0, %s523
        $region36: #{da_transformer_forward.1} parent=31 // pred_fallthru
          _
        // Predicated region
        $region37: #{da_transformer_forward.1} parent=31 // pred_check
          %p525 = pneg %p126
        $region38: #{da_transformer_forward.1} parent=31 // pred_check_branch
          %527 = sbr.rel (%p525) target = $region40
        $region39: #{da_transformer_forward.1} parent=31 // pred_region
          %p528 = scmp.lt.s32.totalorder %s34, 1
          %s529 = scalar_select %p528, %s34, 1
          %s530 = smul.addr %s529, 4
          %s531 = smul.addr %s530, 8
          %s532 = scalar_lea.vmem %s3, %s531
        $region40: #{da_transformer_forward.1} parent=31 // pred_fallthru
          _
        // Predicated region
        $region41: #{da_transformer_forward.1} parent=31 // pred_check
          %p533 = pneg %p152
        $region42: #{da_transformer_forward.1} parent=31 // pred_check_branch
          %535 = sbr.rel (%p533) target = $region44
        $region43: #{da_transformer_forward.1} parent=31 // pred_region
          %p536 = scmp.lt.s32.totalorder %s34, 1
          %s537 = scalar_select %p536, %s34, 1
          %s538 = scalar_lea.vmem %s4, %s537
        $region44: #{da_transformer_forward.1} parent=31 // pred_fallthru
          _
        // Predicated region
        $region45: #{da_transformer_forward.1} parent=31 // pred_check
          %p539 = pneg %p178
        $region46: #{da_transformer_forward.1} parent=31 // pred_check_branch
          %541 = sbr.rel (%p539) target = $region48
        $region47: #{da_transformer_forward.1} parent=31 // pred_region
          %p542 = scmp.lt.s32.totalorder %s34, 1
          %s543 = scalar_select %p542, %s34, 1
          %s544 = smul.addr %s543, 4
          %s545 = smul.addr %s544, 8
          %s546 = scalar_lea.vmem %s5, %s545
        $region48: #{da_transformer_forward.1} parent=31 // pred_fallthru
          _
        // Predicated region
        $region49: #{da_transformer_forward.1} parent=31 // pred_check
          %p547 = pneg %p204
        $region50: #{da_transformer_forward.1} parent=31 // pred_check_branch
          %549 = sbr.rel (%p547) target = $region52
        $region51: #{da_transformer_forward.1} parent=31 // pred_region
          %p550 = scmp.lt.s32.totalorder %s34, 1
          %s551 = scalar_select %p550, %s34, 1
          %s552 = scalar_lea.vmem %s6, %s551
        $region52: #{da_transformer_forward.1} parent=31 // pred_fallthru
          _
        // Predicated region
        $region53: #{da_transformer_forward.1} parent=31 // pred_check
          %p553 = pneg %p230
        $region54: #{da_transformer_forward.1} parent=31 // pred_check_branch
          %555 = sbr.rel (%p553) target = $region56
        $region55: #{da_transformer_forward.1} parent=31 // pred_region
          %p556 = scmp.lt.s32.totalorder %s34, 1
          %s557 = scalar_select %p556, %s34, 1
          %s558 = smul.addr %s557, 4
          %s559 = smul.addr %s558, 8
          %s560 = scalar_lea.vmem %s7, %s559
        $region56: #{da_transformer_forward.1} parent=31 // pred_fallthru
          _
        // Predicated region
        $region57: #{da_transformer_forward.1} parent=31 // pred_check
          %p561 = pneg %p256
        $region58: #{da_transformer_forward.1} parent=31 // pred_check_branch
          %563 = sbr.rel (%p561) target = $region60
        $region59: #{da_transformer_forward.1} parent=31 // pred_region
          %p564 = scmp.lt.s32.totalorder %s34, 1
          %s565 = scalar_select %p564, %s34, 1
          %s566 = scalar_lea.vmem %s8, %s565
        $region60: #{da_transformer_forward.1} parent=31 // pred_fallthru
          _
        // Predicated region
        $region61: #{da_transformer_forward.1} parent=31 // pred_check
          %p567 = pneg %p282
        $region62: #{da_transformer_forward.1} parent=31 // pred_check_branch
          %569 = sbr.rel (%p567) target = $region64
        $region63: #{da_transformer_forward.1} parent=31 // pred_region
          %p570 = scmp.lt.s32.totalorder %s34, 1
          %s571 = scalar_select %p570, %s34, 1
          %s572 = smul.addr %s571, 8
          %s573 = smul.addr %s572, 8
          %s574 = scalar_lea.vmem %s9, %s573
        $region64: #{da_transformer_forward.1} parent=31 // pred_fallthru
          _
        // Predicated region
        $region65: #{da_transformer_forward.1} parent=31 // pred_check
          %p575 = pneg %p308
        $region66: #{da_transformer_forward.1} parent=31 // pred_check_branch
          %577 = sbr.rel (%p575) target = $region68
        $region67: #{da_transformer_forward.1} parent=31 // pred_region
          %p578 = scmp.lt.s32.totalorder %s34, 1
          %s579 = scalar_select %p578, %s34, 1
          %s580 = scalar_lea.vmem %s10, %s579
        $region68: #{da_transformer_forward.1} parent=31 // pred_fallthru
          _
        // Predicated region
        $region69: #{da_transformer_forward.1} parent=31 // pred_check
          %p581 = pneg %p334
        $region70: #{da_transformer_forward.1} parent=31 // pred_check_branch
          %583 = sbr.rel (%p581) target = $region72
        $region71: #{da_transformer_forward.1} parent=31 // pred_region
          %p584 = scmp.lt.s32.totalorder %s34, 1
          %s585 = scalar_select %p584, %s34, 1
          %s586 = scalar_lea.vmem %s11, %s585
        $region72: #{da_transformer_forward.1} parent=31 // pred_fallthru
          _
        // Predicated region
        $region73: #{da_transformer_forward.1} parent=31 // pred_check
          %p587 = pneg %p360
        $region74: #{da_transformer_forward.1} parent=31 // pred_check_branch
          %589 = sbr.rel (%p587) target = $region76
        $region75: #{da_transformer_forward.1} parent=31 // pred_region
          %p590 = scmp.lt.s32.totalorder %s34, 1
          %s591 = scalar_select %p590, %s34, 1
          %s592 = scalar_lea.vmem %s12, %s591
        $region76: #{da_transformer_forward.1} parent=31 // pred_fallthru
          _
        // Predicated region
        $region77: #{da_transformer_forward.1} parent=31 // pred_check
          %p593 = pneg %p386
        $region78: #{da_transformer_forward.1} parent=31 // pred_check_branch
          %595 = sbr.rel (%p593) target = $region80
        $region79: #{da_transformer_forward.1} parent=31 // pred_region
          %p596 = scmp.lt.s32.totalorder %s34, 1
          %s597 = scalar_select %p596, %s34, 1
          %s598 = scalar_lea.vmem %s13, %s597
        $region80: #{da_transformer_forward.1} parent=31 // pred_fallthru
          _
        // Predicated region
        $region81: #{da_transformer_forward.1} parent=31 // pred_check
          %p599 = pneg %p412
        $region82: #{da_transformer_forward.1} parent=31 // pred_check_branch
          %601 = sbr.rel (%p599) target = $region84
        $region83: #{da_transformer_forward.1} parent=31 // pred_region
          %p602 = scmp.lt.s32.totalorder %s34, 1
          %s603 = scalar_select %p602, %s34, 1
          %s604 = scalar_lea.vmem %s14, %s603
        $region84: #{da_transformer_forward.1} parent=31 // pred_fallthru
          _
      $region32: #{da_transformer_forward.1} parent=5 // pred_fallthru
        _
      %p605 = scmp.le.s32.totalorder 1, %s26
      %p606 = scmp.lt.s32.totalorder %s26, 5
      %p607 = pnand %p605, %p606
      %p608 = pneg %p607
      // Predicated region
      $region85: #{da_transformer_forward.1} parent=5 // pred_check
        _
      $region86: #{da_transformer_forward.1} parent=5 // pred_check_branch
        %610 = sbr.rel (%p607) target = $region88
      $region87: #{da_transformer_forward.1} parent=5 // pred_region
        %s611 = ssub.s32 %s26, 1
        %p612 = scmp.lt.s32.totalorder %s35, 1
        %s613 = scalar_select %p612, %s35, 1
        %s614 = smul.addr %s613, 2
        %s615 = smul.addr %s614, 8
        %s616 = scalar_lea.vmem %s0, %s615
        %p617 = pneg %p64
        %p618 = pneg %p61
        %p619 = pneg %p85
        %p620 = pneg %p82
        %p621 = pneg %p106
        %p622 = pneg %p103
        %p623 = scmp.lt.s32.totalorder %s36, 1
        %s624 = scalar_select %p623, %s36, 1
        %s625 = smul.addr %s624, 4
        %s626 = smul.addr %s625, 8
        %s627 = scalar_lea.vmem %s3, %s626
        %p628 = pneg %p132
        %p629 = pneg %p129
        %p630 = scmp.lt.s32.totalorder %s36, 1
        %s631 = scalar_select %p630, %s36, 1
        %s632 = scalar_lea.vmem %s4, %s631
        %p633 = pneg %p158
        %p634 = pneg %p155
        %p635 = scmp.lt.s32.totalorder %s36, 1
        %s636 = scalar_select %p635, %s36, 1
        %s637 = smul.addr %s636, 4
        %s638 = smul.addr %s637, 8
        %s639 = scalar_lea.vmem %s5, %s638
        %p640 = pneg %p184
        %p641 = pneg %p181
        %p642 = scmp.lt.s32.totalorder %s36, 1
        %s643 = scalar_select %p642, %s36, 1
        %s644 = scalar_lea.vmem %s6, %s643
        %p645 = pneg %p210
        %p646 = pneg %p207
        %p647 = scmp.lt.s32.totalorder %s36, 1
        %s648 = scalar_select %p647, %s36, 1
        %s649 = smul.addr %s648, 4
        %s650 = smul.addr %s649, 8
        %s651 = scalar_lea.vmem %s7, %s650
        %p652 = pneg %p236
        %p653 = pneg %p233
        %p654 = scmp.lt.s32.totalorder %s36, 1
        %s655 = scalar_select %p654, %s36, 1
        %s656 = scalar_lea.vmem %s8, %s655
        %p657 = pneg %p262
        %p658 = pneg %p259
        %p659 = scmp.lt.s32.totalorder %s36, 1
        %s660 = scalar_select %p659, %s36, 1
        %s661 = smul.addr %s660, 8
        %s662 = smul.addr %s661, 8
        %s663 = scalar_lea.vmem %s9, %s662
        %p664 = pneg %p288
        %p665 = pneg %p285
        %p666 = scmp.lt.s32.totalorder %s36, 1
        %s667 = scalar_select %p666, %s36, 1
        %s668 = scalar_lea.vmem %s10, %s667
        %p669 = pneg %p314
        %p670 = pneg %p311
        %p671 = scmp.lt.s32.totalorder %s36, 1
        %s672 = scalar_select %p671, %s36, 1
        %s673 = scalar_lea.vmem %s11, %s672
        %p674 = pneg %p340
        %p675 = pneg %p337
        %p676 = scmp.lt.s32.totalorder %s36, 1
        %s677 = scalar_select %p676, %s36, 1
        %s678 = scalar_lea.vmem %s12, %s677
        %p679 = pneg %p366
        %p680 = pneg %p363
        %p681 = scmp.lt.s32.totalorder %s36, 1
        %s682 = scalar_select %p681, %s36, 1
        %s683 = scalar_lea.vmem %s13, %s682
        %p684 = pneg %p392
        %p685 = pneg %p389
        %p686 = scmp.lt.s32.totalorder %s36, 1
        %s687 = scalar_select %p686, %s36, 1
        %s688 = scalar_lea.vmem %s14, %s687
        %p689 = pneg %p418
        %p690 = pneg %p415
        %p691 = pneg %p439
        %p692 = pneg %p436
        %p693 = pneg %p460
        %p694 = pneg %p457
        %p695 = pneg %p486
        %p696 = pneg %p483
        %s697 = sand.u32 %s473, 1
        %s698 = scalar_lea.sflag [#allocation5], %s697
        %s699 = sand.u32 %s473, 1
        %s700 = smul.addr %s699, 16
        %s701 = scalar_lea.vmem [#allocation4], %s700
        %p702 = scmp.lt.s32.totalorder %s35, 1
        %s703 = scalar_select %p702, %s35, 1
        %s704 = smul.addr %s703, 2
        %s705 = smul.addr %s704, 8
        %s706 = scalar_lea.vmem %s0, %s705
        %p707 = scmp.lt.s32.totalorder %s36, 1
        %s708 = scalar_select %p707, %s36, 1
        %s709 = smul.addr %s708, 4
        %s710 = smul.addr %s709, 8
        %s711 = scalar_lea.vmem %s3, %s710
        %p712 = scmp.lt.s32.totalorder %s36, 1
        %s713 = scalar_select %p712, %s36, 1
        %s714 = scalar_lea.vmem %s4, %s713
        %p715 = scmp.lt.s32.totalorder %s36, 1
        %s716 = scalar_select %p715, %s36, 1
        %s717 = smul.addr %s716, 4
        %s718 = smul.addr %s717, 8
        %s719 = scalar_lea.vmem %s5, %s718
        %p720 = scmp.lt.s32.totalorder %s36, 1
        %s721 = scalar_select %p720, %s36, 1
        %s722 = scalar_lea.vmem %s6, %s721
        %p723 = scmp.lt.s32.totalorder %s36, 1
        %s724 = scalar_select %p723, %s36, 1
        %s725 = smul.addr %s724, 4
        %s726 = smul.addr %s725, 8
        %s727 = scalar_lea.vmem %s7, %s726
        %p728 = scmp.lt.s32.totalorder %s36, 1
        %s729 = scalar_select %p728, %s36, 1
        %s730 = scalar_lea.vmem %s8, %s729
        %p731 = scmp.lt.s32.totalorder %s36, 1
        %s732 = scalar_select %p731, %s36, 1
        %s733 = smul.addr %s732, 8
        %s734 = smul.addr %s733, 8
        %s735 = scalar_lea.vmem %s9, %s734
        %p736 = scmp.lt.s32.totalorder %s36, 1
        %s737 = scalar_select %p736, %s36, 1
        %s738 = scalar_lea.vmem %s10, %s737
        %p739 = scmp.lt.s32.totalorder %s36, 1
        %s740 = scalar_select %p739, %s36, 1
        %s741 = scalar_lea.vmem %s11, %s740
        %p742 = scmp.lt.s32.totalorder %s36, 1
        %s743 = scalar_select %p742, %s36, 1
        %s744 = scalar_lea.vmem %s12, %s743
        %p745 = scmp.lt.s32.totalorder %s36, 1
        %s746 = scalar_select %p745, %s36, 1
        %s747 = scalar_lea.vmem %s13, %s746
        %p748 = scmp.lt.s32.totalorder %s36, 1
        %s749 = scalar_select %p748, %s36, 1
        %s750 = scalar_lea.vmem %s14, %s749
        %p751 = scmp.eq.s32.totalorder %s36, 0
        // Predicated region
        $region89: #{da_transformer_forward.1} parent=87 // pred_check
          %p752 = pneg %p751
        $region90: #{da_transformer_forward.1} parent=87 // pred_check_branch
          %754 = sbr.rel (%p752) target = $region92
        $region91: #{da_transformer_forward.1} parent=87 // pred_region
          %v755 = vld [vmem:[%s1] sm:$0xff]
          %v756 = vld [vmem:[%s2] sm:$0x1]
          %v757 = vld [vmem:[%s706] sm:$0xff]
          %v758 = vld [vmem:[%s706 + $0x8] sm:$0xff]
          %v760 = vperm.slane %v756, 0
          %vm762 = vcmask 64512
          %v764 = vsel %vm762, %v757, 0
          %v767 = vsel %vm762, %v758, 0
          %769 = vmatpush.msra.mxu0 0.0
          %770 = vmatpush.msra.mxu0 0.0
          %771 = vmatpush.msra.mxu0 0.0
          %772 = vmatpush.msra.mxu0 0.0
          %773 = vmatpush.msra.mxu0 0.0
          %774 = vmatpush.msra.mxu0 0.0
          %775 = vmatpush.msra.mxu0 0.0
          %776 = vmatpush.msra.mxu0 0.0
          %777 = vmatpush.msra.mxu0 0.0
          %778 = vmatpush.msra.mxu0 0.0
          %779 = vmatpush.msra.mxu0 0.0
          %780 = vmatpush.msra.mxu0 0.0
          %781 = vmatpush.msra.mxu0 0.0
          %782 = vmatpush.msra.mxu0 0.0
          %783 = vmatpush.msra.mxu0 0.0
          %784 = vmatpush.msra.mxu0 %v755
          %785 = vmatmul.f32.gmra.mxu0 %v764
          %v786 = vpop.f32.mrf.mxu0
          %v787 = vadd.f32 %v760, %v786
          %788 = vmatmul.f32.gmra.mxu0 %v767
          %v789 = vpop.f32.mrf.mxu0
          %v790 = vadd.f32 %v760, %v789
          %791 = vdwg.mxu0
          %vm792 = vcmask 261120
          %793 = vst.msk [vmem:[#allocation2] sm:$0xff] %vm792, %v787
          %794 = vst.msk [vmem:[#allocation2 + $0x8] sm:$0xff] %vm792, %v790
        $region92: #{da_transformer_forward.1} parent=87 // pred_fallthru
          _
        %v795 = vld [vmem:[#allocation2] sm:$0xff]
        %v796 = vld [vmem:[#allocation2 + $0x8] sm:$0xff]
        %v797 = vld [vmem:[%s711] sm:$0xff]
        %v798 = vld [vmem:[%s711 + $0x8] sm:$0xff]
        %v799 = vld [vmem:[%s711 + $0x10] sm:$0xff]
        %v800 = vld [vmem:[%s711 + $0x18] sm:$0xff]
        %v801 = vld [vmem:[%s714] sm:$0x1]
        %v803 = vperm.slane %v801, 0
        %vm805 = vcmask 261120
        %v807 = vsel %vm805, %v795, 0
        %v810 = vsel %vm805, %v796, 0
        %812 = vmatpush.msra.mxu0 0.0
        %813 = vmatpush.msra.mxu0 0.0
        %814 = vmatpush.msra.mxu0 0.0
        %815 = vmatpush.msra.mxu0 0.0
        %816 = vmatpush.msra.mxu0 0.0
        %817 = vmatpush.msra.mxu0 0.0
        %818 = vmatpush.msra.mxu0 0.0
        %819 = vmatpush.msra.mxu0 0.0
        %820 = vmatpush.msra.mxu0 0.0
        %821 = vmatpush.msra.mxu0 0.0
        %822 = vmatpush.msra.mxu0 0.0
        %823 = vmatpush.msra.mxu0 0.0
        %824 = vmatpush.msra.mxu0 %v800
        %825 = vmatpush.msra.mxu0 %v799
        %826 = vmatpush.msra.mxu0 %v798
        %827 = vmatpush.msra.mxu0 %v797
        %828 = vmatmul.f32.gmra.mxu0 %v807
        %v829 = vpop.f32.mrf.mxu0
        %v830 = vadd.f32 %v803, %v829
        %831 = vmatmul.f32.gmra.mxu0 %v810
        %v832 = vpop.f32.mrf.mxu0
        %v833 = vadd.f32 %v803, %v832
        %834 = vdwg.mxu0
        %837 = vrot.lane.b32.xlu0 %v830, 96
        %v838 = vpop.permute.xlu0 %837
        %839 = vrot.lane.b32.xlu0 %v833, 96
        %v840 = vpop.permute.xlu0 %839
        %vm841 = vcmask 64512
        %v842 = vsel %vm841, %v830, 0
        %v844 = vsel %vm841, %v833, 0
        %v846 = vsel %vm841, %v838, 0
        %v848 = vsel %vm841, %v840, 0
        %850 = vmatpush.xpose.msra.mxu0 0.0
        %851 = vmatpush.xpose.msra.mxu0 0.0
        %852 = vmatpush.xpose.msra.mxu0 0.0
        %853 = vmatpush.xpose.msra.mxu0 0.0
        %854 = vmatpush.xpose.msra.mxu0 0.0
        %855 = vmatpush.xpose.msra.mxu0 0.0
        %856 = vmatpush.xpose.msra.mxu0 0.0
        %857 = vmatpush.xpose.msra.mxu0 0.0
        %858 = vmatpush.xpose.msra.mxu0 0.0
        %859 = vmatpush.xpose.msra.mxu0 0.0
        %860 = vmatpush.xpose.msra.mxu0 0.0
        %861 = vmatpush.xpose.msra.mxu0 0.0
        %862 = vmatpush.xpose.msra.mxu0 0.0
        %863 = vmatpush.xpose.msra.mxu0 0.0
        %864 = vmatpush.xpose.msra.mxu0 %v848
        %865 = vmatpush.xpose.msra.mxu0 %v846
        %866 = vmatmul.f32.gmra.mxu0 %v842
        %v867 = vpop.f32.mrf.mxu0
        %v868 = vadd.f32 0.0, %v867
        %869 = vmatmul.f32.gmra.mxu0 %v844
        %v870 = vpop.f32.mrf.mxu0
        %v871 = vadd.f32 0.0, %v870
        %872 = vdwg.mxu0
        %vm873 = vcmask 130048
        %v874 = vsel %vm873, %v868, -inf
        %875 = vmax.xlane.f32.xlu0 %v874
        %v876 = vpop.xlane.xlu0 %875
        %v877 = vsel %vm873, %v871, -inf
        %878 = vmax.xlane.f32.xlu0 %v877
        %v879 = vpop.xlane.xlu0 %878
        %v880 = vsub.f32 %v868, %v876
        %v881 = vsub.f32 %v871, %v879
        %v882 = vmul.f32 %v880, 1.442695
        %v883 = vpow.pop %v882
        %v884 = vmul.f32 %v881, 1.442695
        %v885 = vpow.pop %v884
        %v886 = vsel %vm873, %v883, 0.0
        %887 = vadd.xlane.f32.xlu0 %v886
        %v888 = vpop.xlane.xlu0 %887
        %v889 = vsel %vm873, %v885, 0.0
        %890 = vadd.xlane.f32.xlu0 %v889
        %v891 = vpop.xlane.xlu0 %890
        %v892 = vrcp.pop %v888
        %v893 = vrcp.pop %v891
        %v894 = vmul.f32 %v883, %v892
        %v895 = vmul.f32 %v885, %v893
        %896 = vrot.lane.b32.xlu0 %v830, 64
        %v897 = vpop.permute.xlu0 %896
        %898 = vrot.lane.b32.xlu0 %v833, 64
        %v899 = vpop.permute.xlu0 %898
        %v903 = vsel %vm873, %v894, 0
        %v906 = vsel %vm873, %v895, 0
        %908 = vmatpush.msra.mxu0 0.0
        %909 = vmatpush.msra.mxu0 0.0
        %910 = vmatpush.msra.mxu0 0.0
        %911 = vmatpush.msra.mxu0 0.0
        %912 = vmatpush.msra.mxu0 0.0
        %913 = vmatpush.msra.mxu0 0.0
        %914 = vmatpush.msra.mxu0 0.0
        %915 = vmatpush.msra.mxu0 0.0
        %916 = vmatpush.msra.mxu0 0.0
        %917 = vmatpush.msra.mxu0 0.0
        %918 = vmatpush.msra.mxu0 0.0
        %919 = vmatpush.msra.mxu0 0.0
        %920 = vmatpush.msra.mxu0 0.0
        %921 = vmatpush.msra.mxu0 0.0
        %922 = vmatpush.msra.mxu0 %v899
        %923 = vmatpush.msra.mxu0 %v897
        %924 = vmatmul.f32.gmra.mxu0 %v903
        %v925 = vpop.f32.mrf.mxu0
        %v926 = vadd.f32 0.0, %v925
        %927 = vmatmul.f32.gmra.mxu0 %v906
        %v928 = vpop.f32.mrf.mxu0
        %v929 = vadd.f32 0.0, %v928
        %930 = vdwg.mxu0
        %931 = vst.msk [vmem:[#allocation3] sm:$0xff] %vm841, %v926
        %932 = vst.msk [vmem:[#allocation3 + $0x8] sm:$0xff] %vm841, %v929
        %933 = vrot.lane.b32.xlu0 %v830, 120
        %v934 = vpop.permute.xlu0 %933
        %935 = vrot.lane.b32.xlu0 %v833, 120
        %v936 = vpop.permute.xlu0 %935
        %937 = vrot.lane.b32.xlu0 %v830, 88
        %v938 = vpop.permute.xlu0 %937
        %939 = vrot.lane.b32.xlu0 %v833, 88
        %v940 = vpop.permute.xlu0 %939
        %v941 = vsel %vm841, %v934, 0
        %v943 = vsel %vm841, %v936, 0
        %v945 = vsel %vm841, %v938, 0
        %v947 = vsel %vm841, %v940, 0
        %949 = vmatpush.xpose.msra.mxu0 0.0
        %950 = vmatpush.xpose.msra.mxu0 0.0
        %951 = vmatpush.xpose.msra.mxu0 0.0
        %952 = vmatpush.xpose.msra.mxu0 0.0
        %953 = vmatpush.xpose.msra.mxu0 0.0
        %954 = vmatpush.xpose.msra.mxu0 0.0
        %955 = vmatpush.xpose.msra.mxu0 0.0
        %956 = vmatpush.xpose.msra.mxu0 0.0
        %957 = vmatpush.xpose.msra.mxu0 0.0
        %958 = vmatpush.xpose.msra.mxu0 0.0
        %959 = vmatpush.xpose.msra.mxu0 0.0
        %960 = vmatpush.xpose.msra.mxu0 0.0
        %961 = vmatpush.xpose.msra.mxu0 0.0
        %962 = vmatpush.xpose.msra.mxu0 0.0
        %963 = vmatpush.xpose.msra.mxu0 %v947
        %964 = vmatpush.xpose.msra.mxu0 %v945
        %965 = vmatmul.f32.gmra.mxu0 %v941
        %v966 = vpop.f32.mrf.mxu0
        %v967 = vadd.f32 0.0, %v966
        %968 = vmatmul.f32.gmra.mxu0 %v943
        %v969 = vpop.f32.mrf.mxu0
        %v970 = vadd.f32 0.0, %v969
        %971 = vdwg.mxu0
        %v972 = vsel %vm873, %v967, -inf
        %973 = vmax.xlane.f32.xlu0 %v972
        %v974 = vpop.xlane.xlu0 %973
        %v975 = vsel %vm873, %v970, -inf
        %976 = vmax.xlane.f32.xlu0 %v975
        %v977 = vpop.xlane.xlu0 %976
        %v978 = vsub.f32 %v967, %v974
        %v979 = vsub.f32 %v970, %v977
        %v980 = vmul.f32 %v978, 1.442695
        %v981 = vpow.pop %v980
        %v982 = vmul.f32 %v979, 1.442695
        %v983 = vpow.pop %v982
        %v984 = vsel %vm873, %v981, 0.0
        %985 = vadd.xlane.f32.xlu0 %v984
        %v986 = vpop.xlane.xlu0 %985
        %v987 = vsel %vm873, %v983, 0.0
        %988 = vadd.xlane.f32.xlu0 %v987
        %v989 = vpop.xlane.xlu0 %988
        %v990 = vrcp.pop %v986
        %v991 = vrcp.pop %v989
        %v992 = vmul.f32 %v981, %v990
        %v993 = vmul.f32 %v983, %v991
        %994 = vrot.lane.b32.xlu0 %v830, 56
        %v995 = vpop.permute.xlu0 %994
        %996 = vrot.lane.b32.xlu0 %v833, 56
        %v997 = vpop.permute.xlu0 %996
        %v1001 = vsel %vm873, %v992, 0
        %v1004 = vsel %vm873, %v993, 0
        %1006 = vmatpush.msra.mxu0 0.0
        %1007 = vmatpush.msra.mxu0 0.0
        %1008 = vmatpush.msra.mxu0 0.0
        %1009 = vmatpush.msra.mxu0 0.0
        %1010 = vmatpush.msra.mxu0 0.0
        %1011 = vmatpush.msra.mxu0 0.0
        %1012 = vmatpush.msra.mxu0 0.0
        %1013 = vmatpush.msra.mxu0 0.0
        %1014 = vmatpush.msra.mxu0 0.0
        %1015 = vmatpush.msra.mxu0 0.0
        %1016 = vmatpush.msra.mxu0 0.0
        %1017 = vmatpush.msra.mxu0 0.0
        %1018 = vmatpush.msra.mxu0 0.0
        %1019 = vmatpush.msra.mxu0 0.0
        %1020 = vmatpush.msra.mxu0 %v997
        %1021 = vmatpush.msra.mxu0 %v995
        %1022 = vmatmul.f32.gmra.mxu0 %v1001
        %v1023 = vpop.f32.mrf.mxu0
        %v1024 = vadd.f32 0.0, %v1023
        %1025 = vmatmul.f32.gmra.mxu0 %v1004
        %v1026 = vpop.f32.mrf.mxu0
        %v1027 = vadd.f32 0.0, %v1026
        %1028 = vdwg.mxu0
        %1031 = vrot.lane.b32.xlu0 %v1024, 8
        %v1032 = vpop.permute.xlu0 %1031
        %1033 = vrot.lane.b32.xlu0 %v1027, 8
        %v1034 = vpop.permute.xlu0 %1033
        %vm1037 = vcmask 130112
        %1038 = vst.msk [vmem:[#allocation3] sm:$0xff] %vm1037, %v1032
        %1039 = vst.msk [vmem:[#allocation3 + $0x8] sm:$0xff] %vm1037, %v1034
        %1040 = vrot.lane.b32.xlu0 %v830, 112
        %v1041 = vpop.permute.xlu0 %1040
        %1042 = vrot.lane.b32.xlu0 %v833, 112
        %v1043 = vpop.permute.xlu0 %1042
        %1044 = vrot.lane.b32.xlu0 %v830, 80
        %v1045 = vpop.permute.xlu0 %1044
        %1046 = vrot.lane.b32.xlu0 %v833, 80
        %v1047 = vpop.permute.xlu0 %1046
        %v1048 = vsel %vm841, %v1041, 0
        %v1050 = vsel %vm841, %v1043, 0
        %v1052 = vsel %vm841, %v1045, 0
        %v1054 = vsel %vm841, %v1047, 0
        %1056 = vmatpush.xpose.msra.mxu0 0.0
        %1057 = vmatpush.xpose.msra.mxu0 0.0
        %1058 = vmatpush.xpose.msra.mxu0 0.0
        %1059 = vmatpush.xpose.msra.mxu0 0.0
        %1060 = vmatpush.xpose.msra.mxu0 0.0
        %1061 = vmatpush.xpose.msra.mxu0 0.0
        %1062 = vmatpush.xpose.msra.mxu0 0.0
        %1063 = vmatpush.xpose.msra.mxu0 0.0
        %1064 = vmatpush.xpose.msra.mxu0 0.0
        %1065 = vmatpush.xpose.msra.mxu0 0.0
        %1066 = vmatpush.xpose.msra.mxu0 0.0
        %1067 = vmatpush.xpose.msra.mxu0 0.0
        %1068 = vmatpush.xpose.msra.mxu0 0.0
        %1069 = vmatpush.xpose.msra.mxu0 0.0
        %1070 = vmatpush.xpose.msra.mxu0 %v1054
        %1071 = vmatpush.xpose.msra.mxu0 %v1052
        %1072 = vmatmul.f32.gmra.mxu0 %v1048
        %v1073 = vpop.f32.mrf.mxu0
        %v1074 = vadd.f32 0.0, %v1073
        %1075 = vmatmul.f32.gmra.mxu0 %v1050
        %v1076 = vpop.f32.mrf.mxu0
        %v1077 = vadd.f32 0.0, %v1076
        %1078 = vdwg.mxu0
        %v1079 = vsel %vm873, %v1074, -inf
        %1080 = vmax.xlane.f32.xlu0 %v1079
        %v1081 = vpop.xlane.xlu0 %1080
        %v1082 = vsel %vm873, %v1077, -inf
        %1083 = vmax.xlane.f32.xlu0 %v1082
        %v1084 = vpop.xlane.xlu0 %1083
        %v1085 = vsub.f32 %v1074, %v1081
        %v1086 = vsub.f32 %v1077, %v1084
        %v1087 = vmul.f32 %v1085, 1.442695
        %v1088 = vpow.pop %v1087
        %v1089 = vmul.f32 %v1086, 1.442695
        %v1090 = vpow.pop %v1089
        %v1091 = vsel %vm873, %v1088, 0.0
        %1092 = vadd.xlane.f32.xlu0 %v1091
        %v1093 = vpop.xlane.xlu0 %1092
        %v1094 = vsel %vm873, %v1090, 0.0
        %1095 = vadd.xlane.f32.xlu0 %v1094
        %v1096 = vpop.xlane.xlu0 %1095
        %v1097 = vrcp.pop %v1093
        %v1098 = vrcp.pop %v1096
        %v1099 = vmul.f32 %v1088, %v1097
        %v1100 = vmul.f32 %v1090, %v1098
        %1101 = vrot.lane.b32.xlu0 %v830, 48
        %v1102 = vpop.permute.xlu0 %1101
        %1103 = vrot.lane.b32.xlu0 %v833, 48
        %v1104 = vpop.permute.xlu0 %1103
        %v1108 = vsel %vm873, %v1099, 0
        %v1111 = vsel %vm873, %v1100, 0
        %1113 = vmatpush.msra.mxu0 0.0
        %1114 = vmatpush.msra.mxu0 0.0
        %1115 = vmatpush.msra.mxu0 0.0
        %1116 = vmatpush.msra.mxu0 0.0
        %1117 = vmatpush.msra.mxu0 0.0
        %1118 = vmatpush.msra.mxu0 0.0
        %1119 = vmatpush.msra.mxu0 0.0
        %1120 = vmatpush.msra.mxu0 0.0
        %1121 = vmatpush.msra.mxu0 0.0
        %1122 = vmatpush.msra.mxu0 0.0
        %1123 = vmatpush.msra.mxu0 0.0
        %1124 = vmatpush.msra.mxu0 0.0
        %1125 = vmatpush.msra.mxu0 0.0
        %1126 = vmatpush.msra.mxu0 0.0
        %1127 = vmatpush.msra.mxu0 %v1104
        %1128 = vmatpush.msra.mxu0 %v1102
        %1129 = vmatmul.f32.gmra.mxu0 %v1108
        %v1130 = vpop.f32.mrf.mxu0
        %v1131 = vadd.f32 0.0, %v1130
        %1132 = vmatmul.f32.gmra.mxu0 %v1111
        %v1133 = vpop.f32.mrf.mxu0
        %v1134 = vadd.f32 0.0, %v1133
        %1135 = vdwg.mxu0
        %1138 = vrot.lane.b32.xlu0 %v1131, 16
        %v1139 = vpop.permute.xlu0 %1138
        %1140 = vrot.lane.b32.xlu0 %v1134, 16
        %v1141 = vpop.permute.xlu0 %1140
        %vm1144 = vcmask 195712
        %1145 = vst.msk [vmem:[#allocation3] sm:$0xff] %vm1144, %v1139
        %1146 = vst.msk [vmem:[#allocation3 + $0x8] sm:$0xff] %vm1144, %v1141
        %1147 = vrot.lane.b32.xlu0 %v830, 104
        %v1148 = vpop.permute.xlu0 %1147
        %1149 = vrot.lane.b32.xlu0 %v833, 104
        %v1150 = vpop.permute.xlu0 %1149
        %1151 = vrot.lane.b32.xlu0 %v830, 72
        %v1152 = vpop.permute.xlu0 %1151
        %1153 = vrot.lane.b32.xlu0 %v833, 72
        %v1154 = vpop.permute.xlu0 %1153
        %v1155 = vsel %vm841, %v1148, 0
        %v1157 = vsel %vm841, %v1150, 0
        %v1159 = vsel %vm841, %v1152, 0
        %v1161 = vsel %vm841, %v1154, 0
        %1163 = vmatpush.xpose.msra.mxu0 0.0
        %1164 = vmatpush.xpose.msra.mxu0 0.0
        %1165 = vmatpush.xpose.msra.mxu0 0.0
        %1166 = vmatpush.xpose.msra.mxu0 0.0
        %1167 = vmatpush.xpose.msra.mxu0 0.0
        %1168 = vmatpush.xpose.msra.mxu0 0.0
        %1169 = vmatpush.xpose.msra.mxu0 0.0
        %1170 = vmatpush.xpose.msra.mxu0 0.0
        %1171 = vmatpush.xpose.msra.mxu0 0.0
        %1172 = vmatpush.xpose.msra.mxu0 0.0
        %1173 = vmatpush.xpose.msra.mxu0 0.0
        %1174 = vmatpush.xpose.msra.mxu0 0.0
        %1175 = vmatpush.xpose.msra.mxu0 0.0
        %1176 = vmatpush.xpose.msra.mxu0 0.0
        %1177 = vmatpush.xpose.msra.mxu0 %v1161
        %1178 = vmatpush.xpose.msra.mxu0 %v1159
        %1179 = vmatmul.f32.gmra.mxu0 %v1155
        %v1180 = vpop.f32.mrf.mxu0
        %v1181 = vadd.f32 0.0, %v1180
        %1182 = vmatmul.f32.gmra.mxu0 %v1157
        %v1183 = vpop.f32.mrf.mxu0
        %v1184 = vadd.f32 0.0, %v1183
        %1185 = vdwg.mxu0
        %v1186 = vsel %vm873, %v1181, -inf
        %1187 = vmax.xlane.f32.xlu0 %v1186
        %v1188 = vpop.xlane.xlu0 %1187
        %v1189 = vsel %vm873, %v1184, -inf
        %1190 = vmax.xlane.f32.xlu0 %v1189
        %v1191 = vpop.xlane.xlu0 %1190
        %v1192 = vsub.f32 %v1181, %v1188
        %v1193 = vsub.f32 %v1184, %v1191
        %v1194 = vmul.f32 %v1192, 1.442695
        %v1195 = vpow.pop %v1194
        %v1196 = vmul.f32 %v1193, 1.442695
        %v1197 = vpow.pop %v1196
        %v1198 = vsel %vm873, %v1195, 0.0
        %1199 = vadd.xlane.f32.xlu0 %v1198
        %v1200 = vpop.xlane.xlu0 %1199
        %v1201 = vsel %vm873, %v1197, 0.0
        %1202 = vadd.xlane.f32.xlu0 %v1201
        %v1203 = vpop.xlane.xlu0 %1202
        %v1204 = vrcp.pop %v1200
        %v1205 = vrcp.pop %v1203
        %v1206 = vmul.f32 %v1195, %v1204
        %v1207 = vmul.f32 %v1197, %v1205
        %1208 = vrot.lane.b32.xlu0 %v830, 40
        %v1209 = vpop.permute.xlu0 %1208
        %1210 = vrot.lane.b32.xlu0 %v833, 40
        %v1211 = vpop.permute.xlu0 %1210
        %v1215 = vsel %vm873, %v1206, 0
        %v1218 = vsel %vm873, %v1207, 0
        %1220 = vmatpush.msra.mxu0 0.0
        %1221 = vmatpush.msra.mxu0 0.0
        %1222 = vmatpush.msra.mxu0 0.0
        %1223 = vmatpush.msra.mxu0 0.0
        %1224 = vmatpush.msra.mxu0 0.0
        %1225 = vmatpush.msra.mxu0 0.0
        %1226 = vmatpush.msra.mxu0 0.0
        %1227 = vmatpush.msra.mxu0 0.0
        %1228 = vmatpush.msra.mxu0 0.0
        %1229 = vmatpush.msra.mxu0 0.0
        %1230 = vmatpush.msra.mxu0 0.0
        %1231 = vmatpush.msra.mxu0 0.0
        %1232 = vmatpush.msra.mxu0 0.0
        %1233 = vmatpush.msra.mxu0 0.0
        %1234 = vmatpush.msra.mxu0 %v1211
        %1235 = vmatpush.msra.mxu0 %v1209
        %1236 = vmatmul.f32.gmra.mxu0 %v1215
        %v1237 = vpop.f32.mrf.mxu0
        %v1238 = vadd.f32 0.0, %v1237
        %1239 = vmatmul.f32.gmra.mxu0 %v1218
        %v1240 = vpop.f32.mrf.mxu0
        %v1241 = vadd.f32 0.0, %v1240
        %1242 = vdwg.mxu0
        %1245 = vrot.lane.b32.xlu0 %v1238, 24
        %v1246 = vpop.permute.xlu0 %1245
        %1247 = vrot.lane.b32.xlu0 %v1241, 24
        %v1248 = vpop.permute.xlu0 %1247
        %vm1251 = vcmask 261312
        %1252 = vst.msk [vmem:[#allocation3] sm:$0xff] %vm1251, %v1246
        %1253 = vst.msk [vmem:[#allocation3 + $0x8] sm:$0xff] %vm1251, %v1248
        %v1254 = vld [vmem:[#allocation3] sm:$0xff]
        %v1255 = vld [vmem:[#allocation3 + $0x8] sm:$0xff]
        %v1256 = vld [vmem:[%s719] sm:$0xff]
        %v1257 = vld [vmem:[%s719 + $0x8] sm:$0xff]
        %v1258 = vld [vmem:[%s719 + $0x10] sm:$0xff]
        %v1259 = vld [vmem:[%s719 + $0x18] sm:$0xff]
        %v1260 = vld [vmem:[%s722] sm:$0x1]
        %v1262 = vperm.slane %v1260, 0
        %v1265 = vsel %vm805, %v1254, 0
        %v1268 = vsel %vm805, %v1255, 0
        %1270 = vmatpush.msra.mxu0 0.0
        %1271 = vmatpush.msra.mxu0 0.0
        %1272 = vmatpush.msra.mxu0 0.0
        %1273 = vmatpush.msra.mxu0 0.0
        %1274 = vmatpush.msra.mxu0 0.0
        %1275 = vmatpush.msra.mxu0 0.0
        %1276 = vmatpush.msra.mxu0 0.0
        %1277 = vmatpush.msra.mxu0 0.0
        %1278 = vmatpush.msra.mxu0 0.0
        %1279 = vmatpush.msra.mxu0 0.0
        %1280 = vmatpush.msra.mxu0 0.0
        %1281 = vmatpush.msra.mxu0 0.0
        %1282 = vmatpush.msra.mxu0 %v1259
        %1283 = vmatpush.msra.mxu0 %v1258
        %1284 = vmatpush.msra.mxu0 %v1257
        %1285 = vmatpush.msra.mxu0 %v1256
        %1286 = vmatmul.f32.gmra.mxu0 %v1265
        %v1287 = vpop.f32.mrf.mxu0
        %v1288 = vadd.f32 %v1262, %v1287
        %1289 = vmatmul.f32.gmra.mxu0 %v1268
        %v1290 = vpop.f32.mrf.mxu0
        %v1291 = vadd.f32 %v1262, %v1290
        %1292 = vdwg.mxu0
        %v1293 = vadd.f32 %v795, %v1288
        %v1294 = vadd.f32 %v796, %v1291
        %v1295 = vld [vmem:[%s741] sm:$0x1]
        %v1296 = vld [vmem:[%s744] sm:$0x1]
        %v1297 = vsel %vm805, %v1293, 0.0
        %1298 = vadd.xlane.f32.xlu0 %v1297
        %v1299 = vpop.xlane.xlu0 %1298
        %v1300 = vsel %vm805, %v1294, 0.0
        %1301 = vadd.xlane.f32.xlu0 %v1300
        %v1302 = vpop.xlane.xlu0 %1301
        %v1303 = vrcp.pop 32.0
        %v1304 = vmul.f32 32.0, %v1303
        %v1305 = vsub.f32 1.0, %v1304
        %v1306 = vmul.f32 %v1303, %v1305
        %v1307 = vadd.f32 %v1303, %v1306
        %vm1308 = vweird.f32 %v1303
        %v1309 = vsel %vm1308, %v1303, %v1307
        %v1310 = vmul.f32 %v1299, %v1309
        %v1311 = vmul.f32 %v1302, %v1309
        %v1312 = vsub.f32 %v1293, %v1310
        %v1313 = vsub.f32 %v1294, %v1311
        %v1314 = vmul.f32 %v1312, %v1312
        %v1315 = vmul.f32 %v1313, %v1313
        %v1316 = vsel %vm805, %v1314, 0.0
        %1317 = vadd.xlane.f32.xlu0 %v1316
        %v1318 = vpop.xlane.xlu0 %1317
        %v1319 = vsel %vm805, %v1315, 0.0
        %1320 = vadd.xlane.f32.xlu0 %v1319
        %v1321 = vpop.xlane.xlu0 %1320
        %v1322 = vmul.f32 %v1318, %v1309
        %v1323 = vmul.f32 %v1321, %v1309
        %v1324 = vadd.f32 %v1322, 1e-05
        %v1325 = vadd.f32 %v1323, 1e-05
        %v1326 = vrsqrt.pop %v1324
        %v1327 = vmul.f32 %v1326, %v1324
        %v1328 = vmul.f32 %v1327, %v1326
        %v1329 = vmul.f32 0.5, %v1328
        %v1330 = vsub.f32 1.5, %v1329
        %v1331 = vmul.f32 %v1326, %v1330
        %vm1332 = vweird.f32 %v1324
        %vm1333 = vweird.f32 %v1326
        %vm1334 = vmor %vm1332, %vm1333
        %v1335 = vsel %vm1334, %v1326, %v1331
        %v1336 = vrsqrt.pop %v1325
        %v1337 = vmul.f32 %v1336, %v1325
        %v1338 = vmul.f32 %v1337, %v1336
        %v1339 = vmul.f32 0.5, %v1338
        %v1340 = vsub.f32 1.5, %v1339
        %v1341 = vmul.f32 %v1336, %v1340
        %vm1342 = vweird.f32 %v1325
        %vm1343 = vweird.f32 %v1336
        %vm1344 = vmor %vm1342, %vm1343
        %v1345 = vsel %vm1344, %v1336, %v1341
        %v1346 = vmul.f32 %v1312, %v1335
        %v1347 = vmul.f32 %v1313, %v1345
        %v1349 = vperm.slane %v1295, 0
        %v1351 = vmul.f32 %v1346, %v1349
        %v1352 = vmul.f32 %v1347, %v1349
        %v1354 = vperm.slane %v1296, 0
        %v1356 = vadd.f32 %v1351, %v1354
        %v1357 = vadd.f32 %v1352, %v1354
        %v1358 = vld [vmem:[%s727] sm:$0xff]
        %v1359 = vld [vmem:[%s727 + $0x8] sm:$0xff]
        %v1360 = vld [vmem:[%s727 + $0x10] sm:$0xff]
        %v1361 = vld [vmem:[%s727 + $0x18] sm:$0xff]
        %v1362 = vld [vmem:[%s730] sm:$0x1]
        %v1364 = vperm.slane %v1362, 0
        %v1367 = vsel %vm805, %v1356, 0
        %v1370 = vsel %vm805, %v1357, 0
        %1372 = vmatpush.msra.mxu0 0.0
        %1373 = vmatpush.msra.mxu0 0.0
        %1374 = vmatpush.msra.mxu0 0.0
        %1375 = vmatpush.msra.mxu0 0.0
        %1376 = vmatpush.msra.mxu0 0.0
        %1377 = vmatpush.msra.mxu0 0.0
        %1378 = vmatpush.msra.mxu0 0.0
        %1379 = vmatpush.msra.mxu0 0.0
        %1380 = vmatpush.msra.mxu0 0.0
        %1381 = vmatpush.msra.mxu0 0.0
        %1382 = vmatpush.msra.mxu0 0.0
        %1383 = vmatpush.msra.mxu0 0.0
        %1384 = vmatpush.msra.mxu0 %v1361
        %1385 = vmatpush.msra.mxu0 %v1360
        %1386 = vmatpush.msra.mxu0 %v1359
        %1387 = vmatpush.msra.mxu0 %v1358
        %1388 = vmatmul.f32.gmra.mxu0 %v1367
        %v1389 = vpop.f32.mrf.mxu0
        %v1390 = vadd.f32 %v1364, %v1389
        %1391 = vmatmul.f32.gmra.mxu0 %v1370
        %v1392 = vpop.f32.mrf.mxu0
        %v1393 = vadd.f32 %v1364, %v1392
        %1394 = vdwg.mxu0
        %v1395 = vmax.f32 %v1390, 0.0
        %v1396 = vmax.f32 %v1393, 0.0
        %v1397 = vld [vmem:[%s735] sm:$0xff]
        %v1398 = vld [vmem:[%s735 + $0x8] sm:$0xff]
        %v1399 = vld [vmem:[%s735 + $0x10] sm:$0xff]
        %v1400 = vld [vmem:[%s735 + $0x18] sm:$0xff]
        %v1401 = vld [vmem:[%s735 + $0x20] sm:$0xff]
        %v1402 = vld [vmem:[%s735 + $0x28] sm:$0xff]
        %v1403 = vld [vmem:[%s735 + $0x30] sm:$0xff]
        %v1404 = vld [vmem:[%s735 + $0x38] sm:$0xff]
        %v1405 = vld [vmem:[%s738] sm:$0x1]
        %v1407 = vperm.slane %v1405, 0
        %vm1409 = vcmask 523264
        %v1411 = vsel %vm1409, %v1395, 0
        %v1414 = vsel %vm1409, %v1396, 0
        %1416 = vmatpush.msra.mxu0 0.0
        %1417 = vmatpush.msra.mxu0 0.0
        %1418 = vmatpush.msra.mxu0 0.0
        %1419 = vmatpush.msra.mxu0 0.0
        %1420 = vmatpush.msra.mxu0 0.0
        %1421 = vmatpush.msra.mxu0 0.0
        %1422 = vmatpush.msra.mxu0 0.0
        %1423 = vmatpush.msra.mxu0 0.0
        %1424 = vmatpush.msra.mxu0 %v1404
        %1425 = vmatpush.msra.mxu0 %v1403
        %1426 = vmatpush.msra.mxu0 %v1402
        %1427 = vmatpush.msra.mxu0 %v1401
        %1428 = vmatpush.msra.mxu0 %v1400
        %1429 = vmatpush.msra.mxu0 %v1399
        %1430 = vmatpush.msra.mxu0 %v1398
        %1431 = vmatpush.msra.mxu0 %v1397
        %1432 = vmatmul.f32.gmra.mxu0 %v1411
        %v1433 = vpop.f32.mrf.mxu0
        %v1434 = vadd.f32 %v1407, %v1433
        %1435 = vmatmul.f32.gmra.mxu0 %v1414
        %v1436 = vpop.f32.mrf.mxu0
        %v1437 = vadd.f32 %v1407, %v1436
        %1438 = vdwg.mxu0
        %v1439 = vadd.f32 %v1356, %v1434
        %v1440 = vadd.f32 %v1357, %v1437
        %v1441 = vld [vmem:[%s747] sm:$0x1]
        %v1442 = vld [vmem:[%s750] sm:$0x1]
        %v1443 = vsel %vm805, %v1439, 0.0
        %1444 = vadd.xlane.f32.xlu0 %v1443
        %v1445 = vpop.xlane.xlu0 %1444
        %v1446 = vsel %vm805, %v1440, 0.0
        %1447 = vadd.xlane.f32.xlu0 %v1446
        %v1448 = vpop.xlane.xlu0 %1447
        %v1449 = vmul.f32 %v1445, %v1309
        %v1450 = vmul.f32 %v1448, %v1309
        %v1451 = vsub.f32 %v1439, %v1449
        %v1452 = vsub.f32 %v1440, %v1450
        %v1453 = vmul.f32 %v1451, %v1451
        %v1454 = vmul.f32 %v1452, %v1452
        %v1455 = vsel %vm805, %v1453, 0.0
        %1456 = vadd.xlane.f32.xlu0 %v1455
        %v1457 = vpop.xlane.xlu0 %1456
        %v1458 = vsel %vm805, %v1454, 0.0
        %1459 = vadd.xlane.f32.xlu0 %v1458
        %v1460 = vpop.xlane.xlu0 %1459
        %v1461 = vmul.f32 %v1457, %v1309
        %v1462 = vmul.f32 %v1460, %v1309
        %v1463 = vadd.f32 %v1461, 1e-05
        %v1464 = vadd.f32 %v1462, 1e-05
        %v1465 = vrsqrt.pop %v1463
        %v1466 = vmul.f32 %v1465, %v1463
        %v1467 = vmul.f32 %v1466, %v1465
        %v1468 = vmul.f32 0.5, %v1467
        %v1469 = vsub.f32 1.5, %v1468
        %v1470 = vmul.f32 %v1465, %v1469
        %vm1471 = vweird.f32 %v1463
        %vm1472 = vweird.f32 %v1465
        %vm1473 = vmor %vm1471, %vm1472
        %v1474 = vsel %vm1473, %v1465, %v1470
        %v1475 = vrsqrt.pop %v1464
        %v1476 = vmul.f32 %v1475, %v1464
        %v1477 = vmul.f32 %v1476, %v1475
        %v1478 = vmul.f32 0.5, %v1477
        %v1479 = vsub.f32 1.5, %v1478
        %v1480 = vmul.f32 %v1475, %v1479
        %vm1481 = vweird.f32 %v1464
        %vm1482 = vweird.f32 %v1475
        %vm1483 = vmor %vm1481, %vm1482
        %v1484 = vsel %vm1483, %v1475, %v1480
        %v1485 = vmul.f32 %v1451, %v1474
        %v1486 = vmul.f32 %v1452, %v1484
        %v1488 = vperm.slane %v1441, 0
        %v1490 = vmul.f32 %v1485, %v1488
        %v1491 = vmul.f32 %v1486, %v1488
        %v1493 = vperm.slane %v1442, 0
        %v1495 = vadd.f32 %v1490, %v1493
        %v1496 = vadd.f32 %v1491, %v1493
        %1497 = vst.msk [vmem:[#allocation2] sm:$0xff] %vm805, %v1495
        %1498 = vst.msk [vmem:[#allocation2 + $0x8] sm:$0xff] %vm805, %v1496
        %p1499 = scmp.eq.s32.totalorder %s36, 1
        // Predicated region
        $region93: #{da_transformer_forward.1} parent=87 // pred_check
          %p1500 = pneg %p1499
        $region94: #{da_transformer_forward.1} parent=87 // pred_check_branch
          %1502 = sbr.rel (%p1500) target = $region96
        $region95: #{da_transformer_forward.1} parent=87 // pred_region
          %v1503 = vld [vmem:[%s15] sm:$0x1]
          %v1504 = vld [vmem:[%s16] sm:$0x1]
          %v1505 = vsel %vm805, %v1495, 0.0
          %1506 = vadd.xlane.f32.xlu0 %v1505
          %v1507 = vpop.xlane.xlu0 %1506
          %v1508 = vsel %vm805, %v1496, 0.0
          %1509 = vadd.xlane.f32.xlu0 %v1508
          %v1510 = vpop.xlane.xlu0 %1509
          %v1511 = vmul.f32 %v1507, %v1309
          %v1512 = vmul.f32 %v1510, %v1309
          %v1513 = vsub.f32 %v1495, %v1511
          %v1514 = vsub.f32 %v1496, %v1512
          %v1515 = vmul.f32 %v1513, %v1513
          %v1516 = vmul.f32 %v1514, %v1514
          %v1517 = vsel %vm805, %v1515, 0.0
          %1518 = vadd.xlane.f32.xlu0 %v1517
          %v1519 = vpop.xlane.xlu0 %1518
          %v1520 = vsel %vm805, %v1516, 0.0
          %1521 = vadd.xlane.f32.xlu0 %v1520
          %v1522 = vpop.xlane.xlu0 %1521
          %v1523 = vmul.f32 %v1519, %v1309
          %v1524 = vmul.f32 %v1522, %v1309
          %v1525 = vadd.f32 %v1523, 1e-05
          %v1526 = vadd.f32 %v1524, 1e-05
          %v1527 = vrsqrt.pop %v1525
          %v1528 = vmul.f32 %v1527, %v1525
          %v1529 = vmul.f32 %v1528, %v1527
          %v1530 = vmul.f32 0.5, %v1529
          %v1531 = vsub.f32 1.5, %v1530
          %v1532 = vmul.f32 %v1527, %v1531
          %vm1533 = vweird.f32 %v1525
          %vm1534 = vweird.f32 %v1527
          %vm1535 = vmor %vm1533, %vm1534
          %v1536 = vsel %vm1535, %v1527, %v1532
          %v1537 = vrsqrt.pop %v1526
          %v1538 = vmul.f32 %v1537, %v1526
          %v1539 = vmul.f32 %v1538, %v1537
          %v1540 = vmul.f32 0.5, %v1539
          %v1541 = vsub.f32 1.5, %v1540
          %v1542 = vmul.f32 %v1537, %v1541
          %vm1543 = vweird.f32 %v1526
          %vm1544 = vweird.f32 %v1537
          %vm1545 = vmor %vm1543, %vm1544
          %v1546 = vsel %vm1545, %v1537, %v1542
          %v1547 = vmul.f32 %v1513, %v1536
          %v1548 = vmul.f32 %v1514, %v1546
          %v1550 = vperm.slane %v1503, 0
          %v1552 = vmul.f32 %v1547, %v1550
          %v1553 = vmul.f32 %v1548, %v1550
          %v1555 = vperm.slane %v1504, 0
          %v1557 = vadd.f32 %v1552, %v1555
          %v1558 = vadd.f32 %v1553, %v1555
          %1559 = vst.msk [vmem:[%s701] sm:$0xff] %vm805, %v1557
          %1560 = vst.msk [vmem:[%s701 + $0x8] sm:$0xff] %vm805, %v1558
        $region96: #{da_transformer_forward.1} parent=87 // pred_fallthru
          _
        %s1561 = sand.u32 %s473, 1
        %s1562 = scalar_lea.sflag [#allocation5], %s1561
        %s1563 = sand.u32 %s473, 1
        %s1564 = smul.addr %s1563, 16
        %s1565 = scalar_lea.vmem [#allocation4], %s1564
        // Predicated region
        $region97: #{da_transformer_forward.1} parent=87 // pred_check
          %p1566 = pneg %p483
        $region98: #{da_transformer_forward.1} parent=87 // pred_check_branch
          %1568 = sbr.rel (%p1566) target = $region100
        $region99: #{da_transformer_forward.1} parent=87 // pred_region
          %1570 = vsyncadd %s1562, 0
          %s1571 = smul.addr %s35, 2
          %s1572 = smul.addr %s1571, 8
          %s1573 = scalar_lea.hbm %s17, %s1572
          %s1574 = sshll.u32 %s1565, 4
          %s1575 = int_to_ptr.vmem [resolvable:$true] %s1574
          %s1576 = sshll.u32 %s1573, 4
          %s1577 = int_to_ptr.hbm [resolvable:$true] %s1576
          %1582 = dma.vmem_to_hbm [thread:$0]  %s1575, 256, %s1577, %s1562, 128, 128, 8
        $region100: #{da_transformer_forward.1} parent=87 // pred_fallthru
          _
      $region88: #{da_transformer_forward.1} parent=5 // pred_fallthru
        _
      %p1583 = scmp.le.s32.totalorder 2, %s26
      // Predicated region
      $region101: #{da_transformer_forward.1} parent=5 // pred_check
        %p1584 = pneg %p1583
      $region102: #{da_transformer_forward.1} parent=5 // pred_check_branch
        %1586 = sbr.rel (%p1584) target = $region104
      $region103: #{da_transformer_forward.1} parent=5 // pred_region
        %s1587 = ssub.s32 %s26, 2
        // Predicated region
        $region105: #{da_transformer_forward.1} parent=103 // pred_check
          %p1588 = pneg %p489
        $region106: #{da_transformer_forward.1} parent=103 // pred_check_branch
          %1590 = sbr.rel (%p1588) target = $region108
        $region107: #{da_transformer_forward.1} parent=103 // pred_region
          %s1591 = sand.u32 %s474, 1
          %s1592 = scalar_lea.sflag [#allocation5], %s1591
          %s1593 = sand.u32 %s474, 1
          %s1594 = smul.addr %s1593, 16
          %s1595 = scalar_lea.vmem [#allocation4], %s1594
          %1597 = dma.done %s1592, 256
        $region108: #{da_transformer_forward.1} parent=103 // pred_fallthru
          _
      $region104: #{da_transformer_forward.1} parent=5 // pred_fallthru
        _
    $region6: #{da_transformer_forward.1} parent=1 // loop_footer
      %s30 = sadd.s32 1, %s26
    $region7: #{da_transformer_forward.1} parent=1 // loop_footer_branch
      %25 = sbr.rel target = $region3
    $region8: #{da_transformer_forward.1} parent=1 // loop_exit
      _
    %1598 = vsyncpa [#allocation5], 1
    %s1599 = scalar_lea.sflag [#allocation5], 1
    %1600 = vsyncpa %s1599, 1

</llo_original>
